<compile_context>
chip_gen: v6e
topology: v6e:2x2x1
jax: 0.10.0
libtpu: 0.0.40
codegen_flags: <defaults>
</compile_context>

<pallas_src>
import functools

import jax
import jax.numpy as jnp
from jax.experimental import pallas as pl
from jax.experimental.pallas import tpu as pltpu

CLASS_NUMBER = [8, 5, 5, 5, 10, 6, 6, 9]
FEAT_DIM = 2048
N_TOTAL = sum(CLASS_NUMBER)      # 54 logits across the 8 heads
N_PAD = 128                      # pad head outputs to a full lane width (lane-dense vst)
C_PAD = 8                        # pad the tiny channel contraction up to 8 rows
TB_MAX = 256                     # max batch-tile rows (fills the MXU M dimension)


def _pick_batch_tile(batch, row_bytes, tb_max=TB_MAX, x_tile_budget=4 << 20):
    """Pick a batch tile: big enough to amortize per-step overhead, small enough to
    fit VMEM, and giving >=2 grid steps (v7x dual-TensorCore) when the batch allows."""
    vmem_cap = max(8, (x_tile_budget // max(row_bytes, 1)) // 8 * 8)
    tb_max = min(tb_max, vmem_cap)
    b_ru = pl.cdiv(max(batch, 1), 8) * 8          # round to f32 sublane granularity
    if b_ru <= 16:
        return int(min(b_ru, tb_max))             # tiny batch: one small tile
    half = pl.cdiv(b_ru, 2)                       # aim for >=2 grid steps
    tb = pl.cdiv(half, 16) * 16                   # 16-row multiples (bf16 packing)
    return int(max(8, min(tb_max, tb)))


def baseline_kernel(x_ref, wf_ref, wh_ref, out_ref, *, c, hw):
    # x_ref  : (tb, c*hw)        f32 lane-dense input tile (contiguous NCHW flatten)
    # wf_ref : (C_PAD, FEAT_DIM) bf16 backbone-stub projection, 1/(H*W) folded, zero rows
    # wh_ref : (FEAT_DIM, N_PAD) bf16 concatenated fc-head weights (zero-padded lanes)
    # out_ref: (tb, N_PAD)       f32 concatenated head logits (first 54 lanes valid)
    x = x_ref[...]                                       # (tb, c*hw) f32, no copy/cast
    tb = x.shape[0]

    # Global average pooling per channel: each channel chunk is a static, lane-aligned
    # (tb, hw) slice reduced along lanes (XLU slot); 1/(H*W) scale is folded into wf.
    cols = [jnp.sum(x[:, i * hw:(i + 1) * hw], axis=-1, keepdims=True)
            for i in range(c)]
    if c < C_PAD:
        cols.append(jnp.zeros((tb, C_PAD - c), dtype=jnp.float32))
    pooled = jnp.concatenate(cols, axis=-1)              # (tb, C_PAD)

    # Backbone-stub projection on the MXU (K is tiny, but the MXU slot is otherwise
    # idle and this keeps the VALU off the critical path). f32 accumulation.
    feat = jnp.dot(pooled.astype(jnp.bfloat16), wf_ref[...],
                   preferred_element_type=jnp.float32)   # (tb, FEAT_DIM)
    feat = jnp.maximum(feat, 0.0)                        # backbone features post-ReLU

    # All 8 bias-free fc heads fused: (tb, 2048) @ (2048, 128) bf16, f32 accumulation.
    out_ref[...] = jnp.dot(feat.astype(jnp.bfloat16), wh_ref[...],
                           preferred_element_type=jnp.float32)


def pack_weights(w_feat, head_weights, spatial):
    """One-time packing (init-time, not per forward).

    w_feat       : (C, FEAT_DIM) backbone-stub projection.
    head_weights : list of (n_i, FEAT_DIM) torch-style Linear.weight matrices.
    spatial      : H*W, folded into w_feat so the kernel sums instead of averaging.
    """
    wf = (w_feat / float(spatial)).astype(jnp.bfloat16)              # (C, 2048)
    wf = jnp.pad(wf, ((0, C_PAD - wf.shape[0]), (0, 0)))             # (C_PAD, 2048)
    # torch Linear computes y = x @ W.T; concatenate the 8 heads along output columns.
    w_all = jnp.concatenate([w.T for w in head_weights], axis=1)     # (2048, 54)
    w_all = jnp.pad(w_all, ((0, 0), (0, N_PAD - w_all.shape[1])))    # (2048, 128)
    return wf, w_all.astype(jnp.bfloat16)


def baseline_forward(x, wf_packed, wh_packed, *, tb=None):
    """x: (B, C, H, W) float32. Returns the 8 per-head logit arrays (f32)."""
    B, C, H, W = x.shape
    hw = H * W
    row_bytes = C * hw * 4
    if tb is None:
        tb = _pick_batch_tile(B, row_bytes)

    # Lane-dense input view: free reshape of contiguous NCHW; no wrapper cast/pad pass.
    x2 = x.reshape(B, C * hw)

    grid = (pl.cdiv(B, tb),)
    kernel = functools.partial(baseline_kernel, c=C, hw=hw)

    flops = 2 * B * (C_PAD * FEAT_DIM + FEAT_DIM * N_PAD)
    bytes_accessed = (x2.size * 4 + wf_packed.size * 2
                      + wh_packed.size * 2 + B * N_PAD * 4)

    out = pl.pallas_call(
        kernel,
        out_shape=jax.ShapeDtypeStruct((B, N_PAD), jnp.float32),
        grid=grid,
        in_specs=[
            pl.BlockSpec((tb, C * hw), lambda i: (i, 0)),        # pipelined x tile
            pl.BlockSpec((C_PAD, FEAT_DIM), lambda i: (0, 0)),   # VMEM-resident weight
            pl.BlockSpec((FEAT_DIM, N_PAD), lambda i: (0, 0)),   # VMEM-resident weight
        ],
        out_specs=pl.BlockSpec((tb, N_PAD), lambda i: (i, 0)),
        compiler_params=pltpu.CompilerParams(
            dimension_semantics=("parallel",)),                  # shard batch over TCs
        cost_estimate=pl.CostEstimate(
            flops=int(flops), transcendentals=0, bytes_accessed=int(bytes_accessed)),
    )(x2, wf_packed, wh_packed)

    outputs = []                                    # split back into the 8 heads
    off = 0
    for n in CLASS_NUMBER:
        outputs.append(out[:, off:off + n])
        off += n
    return outputs


if __name__ == "__main__":
    key = jax.random.PRNGKey(0)
    k_x, k_wf, *k_heads = jax.random.split(key, 2 + len(CLASS_NUMBER))

    B, C, H, W = 2, 4, 16, 16
    x = jax.random.normal(k_x, (B, C, H, W), dtype=jnp.float32)

    # Backbone-stub projection (deterministic, kaiming-like scale).
    w_feat = jax.random.normal(k_wf, (C, FEAT_DIM), dtype=jnp.float32) * (2.0 / C) ** 0.5

    # 8 fc heads: nn.Linear(2048, n_i, bias=False), init.normal(std=0.001) (model_init).
    head_weights = [
        0.001 * jax.random.normal(k_heads[i], (n, FEAT_DIM), dtype=jnp.float32)
        for i, n in enumerate(CLASS_NUMBER)
    ]

    # One-time weight packing (init-time, outside the forward path).
    wf_packed, wh_packed = pack_weights(w_feat, head_weights, H * W)

    outputs = baseline_forward(x, wf_packed, wh_packed)
    outputs = [jax.block_until_ready(o) for o in outputs]

    assert len(outputs) == 8
    for o, n in zip(outputs, CLASS_NUMBER):
        assert o.shape == (B, n), o.shape

    print("KERNEL_OK")
</pallas_src>

<mosaic_0001>
module attributes {stable_mosaic.version = 11 : i64} {
  func.func @baseline_kernel(%arg0: i32, %arg1: memref<8x1024xf32, #tpu.memory_space<vmem>>, %arg2: memref<8x2048xbf16, #tpu.memory_space<vmem>>, %arg3: memref<2048x128xbf16, #tpu.memory_space<vmem>>, %arg4: memref<8x128xf32, #tpu.memory_space<vmem>>) attributes {dimension_semantics = [#tpu.dimension_semantics<parallel>], iteration_bounds = array<i64: 1>, scalar_prefetch = 0 : i64, scratch_operands = 0 : i64, tpu.core_type = #tpu.core_type<tc>, window_params = [{transform_indices = @transform_0, window_bounds = array<i64: 8, 1024>}, {pipeline_mode = #tpu.pipeline_mode<synchronous>, transform_indices = @transform_1, window_bounds = array<i64: 8, 2048>}, {pipeline_mode = #tpu.pipeline_mode<synchronous>, transform_indices = @transform_2, window_bounds = array<i64: 2048, 128>}, {transform_indices = @transform_3, window_bounds = array<i64: 8, 128>}]} {
    %c0 = arith.constant 0 : index
    %c0_0 = arith.constant 0 : index
    %0 = vector.load %arg1[%c0, %c0_0] : memref<8x1024xf32, #tpu.memory_space<vmem>>, vector<8x1024xf32>
    %1 = vector.extract_strided_slice %0 {offsets = [0, 0], sizes = [8, 256], strides = [1, 1]} : vector<8x1024xf32> to vector<8x256xf32>
    %cst = arith.constant dense<0.000000e+00> : vector<8xf32>
    %2 = vector.multi_reduction <add>, %1, %cst [1] : vector<8x256xf32> to vector<8xf32>
    %3 = vector.shape_cast %2 : vector<8xf32> to vector<8x1xf32>
    %4 = vector.extract_strided_slice %0 {offsets = [0, 256], sizes = [8, 256], strides = [1, 1]} : vector<8x1024xf32> to vector<8x256xf32>
    %cst_1 = arith.constant dense<0.000000e+00> : vector<8xf32>
    %5 = vector.multi_reduction <add>, %4, %cst_1 [1] : vector<8x256xf32> to vector<8xf32>
    %6 = vector.shape_cast %5 : vector<8xf32> to vector<8x1xf32>
    %7 = vector.extract_strided_slice %0 {offsets = [0, 512], sizes = [8, 256], strides = [1, 1]} : vector<8x1024xf32> to vector<8x256xf32>
    %cst_2 = arith.constant dense<0.000000e+00> : vector<8xf32>
    %8 = vector.multi_reduction <add>, %7, %cst_2 [1] : vector<8x256xf32> to vector<8xf32>
    %9 = vector.shape_cast %8 : vector<8xf32> to vector<8x1xf32>
    %10 = vector.extract_strided_slice %0 {offsets = [0, 768], sizes = [8, 256], strides = [1, 1]} : vector<8x1024xf32> to vector<8x256xf32>
    %cst_3 = arith.constant dense<0.000000e+00> : vector<8xf32>
    %11 = vector.multi_reduction <add>, %10, %cst_3 [1] : vector<8x256xf32> to vector<8xf32>
    %12 = vector.shape_cast %11 : vector<8xf32> to vector<8x1xf32>
    %cst_4 = arith.constant 0.000000e+00 : f32
    %13 = vector.broadcast %cst_4 : f32 to vector<8x4xf32>
    %14 = tpu.concatenate %3, %6, %9, %12, %13 in 1 : vector<8x1xf32>, vector<8x1xf32>, vector<8x1xf32>, vector<8x1xf32>, vector<8x4xf32> -> vector<8x8xf32>
    %15 = arith.truncf %14 : vector<8x8xf32> to vector<8x8xbf16>
    %c0_5 = arith.constant 0 : index
    %c0_6 = arith.constant 0 : index
    %16 = vector.load %arg2[%c0_5, %c0_6] : memref<8x2048xbf16, #tpu.memory_space<vmem>>, vector<8x2048xbf16>
    %cst_7 = arith.constant dense<0.000000e+00> : vector<8x2048xf32>
    %17 = tpu.matmul %15, %16, %cst_7 {dimension_numbers = #tpu.dot_dimension_numbers<[1], [0], [0], [1], [0, 0, 1, 1], [], []>} : vector<8x8xbf16>, vector<8x2048xbf16>, vector<8x2048xf32> -> vector<8x2048xf32>
    %cst_8 = arith.constant 0.000000e+00 : f32
    %18 = vector.broadcast %cst_8 : f32 to vector<8x2048xf32>
    %19 = arith.maximumf %17, %18 : vector<8x2048xf32>
    %20 = arith.truncf %19 : vector<8x2048xf32> to vector<8x2048xbf16>
    %c0_9 = arith.constant 0 : index
    %c0_10 = arith.constant 0 : index
    %21 = vector.load %arg3[%c0_9, %c0_10] : memref<2048x128xbf16, #tpu.memory_space<vmem>>, vector<2048x128xbf16>
    %cst_11 = arith.constant dense<0.000000e+00> : vector<8x128xf32>
    %22 = tpu.matmul %20, %21, %cst_11 {dimension_numbers = #tpu.dot_dimension_numbers<[1], [0], [0], [1], [0, 0, 1, 1], [], []>} : vector<8x2048xbf16>, vector<2048x128xbf16>, vector<8x128xf32> -> vector<8x128xf32>
    %c0_12 = arith.constant 0 : index
    %c0_13 = arith.constant 0 : index
    %23 = vector.load %arg4[%c0_12, %c0_13] : memref<8x128xf32, #tpu.memory_space<vmem>>, vector<8x128xf32>
    tpu.vector_store %arg4[%c0_12, %c0_13], %22 {strides = array<i32>} : memref<8x128xf32, #tpu.memory_space<vmem>>, vector<8x128xf32>,
    return
  }
  func.func @transform_0(%arg0: i32) -> (i32, i32) {
    %c0_i32 = arith.constant 0 : i32
    %c0_i32_0 = arith.constant 0 : i32
    return %arg0, %c0_i32 : i32, i32
  }
  func.func @transform_1(%arg0: i32) -> (i32, i32) {
    %c0_i32 = arith.constant 0 : i32
    %c0_i32_0 = arith.constant 0 : i32
    %c0_i32_1 = arith.constant 0 : i32
    return %c0_i32, %c0_i32_0 : i32, i32
  }
  func.func @transform_2(%arg0: i32) -> (i32, i32) {
    %c0_i32 = arith.constant 0 : i32
    %c0_i32_0 = arith.constant 0 : i32
    %c0_i32_1 = arith.constant 0 : i32
    return %c0_i32, %c0_i32_0 : i32, i32
  }
  func.func @transform_3(%arg0: i32) -> (i32, i32) {
    %c0_i32 = arith.constant 0 : i32
    %c0_i32_0 = arith.constant 0 : i32
    return %arg0, %c0_i32 : i32, i32
  }
}

</mosaic_0001>

<llo_original>
// kernel: tpu_custom_call.1
$region0: #{tpu_custom_call.1}
  #allocation0 [shape = 'u32[]', space=smem, size = 0x4, offset = 0x4, fixed_abs, tag = 'smem constant byte address 0x4 - core index']
  #allocation1 [shape = 'u32[144,128]{1,0:T(1,128)}', space=vmem, size = 0x12000, scoped, tag = 'internal scratch']
  %s0 = inlined_call_operand.hbm [shape: f32[2,1024], index: 0, kind: input, shape index: {}]
  %s1 = inlined_call_operand.hbm [shape: bf16[8,2048], index: 1, kind: input, shape index: {}]
  %s2 = inlined_call_operand.hbm [shape: bf16[2048,128], index: 2, kind: input, shape index: {}]
  %s3 = inlined_call_operand.hbm [shape: f32[2,128], index: 3, kind: output, shape index: {}]
  %s4 = sld [smem:[#allocation0]]
  $region34: #{tpu_custom_call.1} parent=0
    _
  %s6 = ssub.s32 1, %s4
  %s7 = scalar_select 0, %s6, %s4
  $region1: #{tpu_custom_call.1} parent=0
    #allocation2 [shape = 'u8[32768]{0}', space=vmem, size = 0x8000, scoped, tag = 'input window, operand 0, single buffered']
    #allocation3 [shape = 's32[1]{0}', space=sflag, size = 0x4, scoped, tag = 'scoped memory for tpu_custom_call.1']
    #allocation4 [shape = 's32[1]{0}', space=sflag, size = 0x4, scoped, tag = 'scoped memory for tpu_custom_call.1']
    #allocation5 [shape = 'u8[32768]{0}', space=vmem, size = 0x8000, scoped, tag = 'input window, operand 1, single buffered']
    #allocation6 [shape = 's32[1]{0}', space=sflag, size = 0x4, scoped, tag = 'scoped memory for tpu_custom_call.1']
    #allocation7 [shape = 'u8[524288]{0}', space=vmem, size = 0x80000, scoped, tag = 'input window, operand 2, single buffered']
    #allocation8 [shape = 'u8[4096]{0}', space=vmem, size = 0x1000, scoped, tag = 'output window, operand 0, single buffered']
    %8 = vsyncpa [#allocation3], 0
    %9 = vsyncpa [#allocation6], 0
    %10 = vsyncpa [#allocation4], 0
    // Predicated region
    $region2: #{tpu_custom_call.1} parent=1 // pred_check
      _
    $region3: #{tpu_custom_call.1} parent=1 // pred_check_branch
      %12 = sbr.rel (0) target = $region5
    $region4: #{tpu_custom_call.1} parent=1 // pred_region
      %s14 = ssub.s32 1024, 256
      %15 = vsyncadd [#allocation3], %s14
      %s16 = sshll.u32 [#allocation2], 4
      %s17 = int_to_ptr.vmem [resolvable:$true] %s16
      %22 = dma.hbm_to_vmem [thread:$0]  %s0, 256, %s17, [#allocation3], 256, 256, 16
    $region5: #{tpu_custom_call.1} parent=1 // pred_fallthru
      _
    // Predicated region
    $region6: #{tpu_custom_call.1} parent=1 // pred_check
      _
    $region7: #{tpu_custom_call.1} parent=1 // pred_check_branch
      %24 = sbr.rel (0) target = $region9
    $region8: #{tpu_custom_call.1} parent=1 // pred_region
      %s26 = ssub.s32 1024, 1024
      %27 = vsyncadd [#allocation6], %s26
      %s29 = sshll.u32 [#allocation5], 4
      %s30 = int_to_ptr.vmem [resolvable:$true] %s29
      %32 = dma.hbm_to_vmem [thread:$0]  %s1, 1024, %s30, [#allocation6]
    $region9: #{tpu_custom_call.1} parent=1 // pred_fallthru
      _
    // Predicated region
    $region10: #{tpu_custom_call.1} parent=1 // pred_check
      _
    $region11: #{tpu_custom_call.1} parent=1 // pred_check_branch
      %34 = sbr.rel (0) target = $region13
    $region12: #{tpu_custom_call.1} parent=1 // pred_region
      %s36 = ssub.s32 16384, 16384
      %37 = vsyncadd [#allocation6], %s36
      %s38 = sshll.u32 [#allocation7], 4
      %s39 = int_to_ptr.vmem [resolvable:$true] %s38
      %44 = dma.hbm_to_vmem [thread:$0]  %s2, 16384, %s39, [#allocation6], 64, 64, 4
    $region13: #{tpu_custom_call.1} parent=1 // pred_fallthru
      _
    // Predicated region
    $region14: #{tpu_custom_call.1} parent=1 // pred_check
      _
    $region15: #{tpu_custom_call.1} parent=1 // pred_check_branch
      %46 = sbr.rel (0) target = $region17
    $region16: #{tpu_custom_call.1} parent=1 // pred_region
      %47 = dma.done [#allocation3], 1024
    $region17: #{tpu_custom_call.1} parent=1 // pred_fallthru
      _
    // Predicated region
    $region18: #{tpu_custom_call.1} parent=1 // pred_check
      _
    $region19: #{tpu_custom_call.1} parent=1 // pred_check_branch
      %49 = sbr.rel (0) target = $region21
    $region20: #{tpu_custom_call.1} parent=1 // pred_region
      %50 = dma.done [#allocation6], 1024
    $region21: #{tpu_custom_call.1} parent=1 // pred_fallthru
      _
    // Predicated region
    $region22: #{tpu_custom_call.1} parent=1 // pred_check
      _
    $region23: #{tpu_custom_call.1} parent=1 // pred_check_branch
      %52 = sbr.rel (0) target = $region25
    $region24: #{tpu_custom_call.1} parent=1 // pred_region
      %53 = dma.done [#allocation6], 16384
    $region25: #{tpu_custom_call.1} parent=1 // pred_fallthru
      _
    %v55 = vld [vmem:[#allocation2] sm:$0xff]
    %v56 = vld [vmem:[#allocation2 + $0x8] sm:$0xff]
    %v57 = vld [vmem:[#allocation2 + $0x10] sm:$0xff]
    %v58 = vld [vmem:[#allocation2 + $0x18] sm:$0xff]
    %v59 = vld [vmem:[#allocation2 + $0x20] sm:$0xff]
    %v60 = vld [vmem:[#allocation2 + $0x28] sm:$0xff]
    %v61 = vld [vmem:[#allocation2 + $0x30] sm:$0xff]
    %v62 = vld [vmem:[#allocation2 + $0x38] sm:$0xff]
    %v67 = vcombine.low %v55, %v57
    %v68 = vcombine.low %v59, %v61
    %v70 = vunpack.c.l.s4 1983009808
    %v71 = vunpack.c.0.s8 %v70
    %v72 = vlaneseq
    %v73 = vshrl.u32 %v72, 7
    %v74 = vsub.s32 %v71, %v73
    %v75 = vrot.slane %v67, %v74
    %v77 = vunpack.c.l.s4 1983009808
    %v78 = vunpack.c.0.s8 %v77
    %v79 = vlaneseq
    %v80 = vshrl.u32 %v79, 7
    %v81 = vsub.s32 %v78, %v80
    %v82 = vrot.slane %v68, %v81
    %v83 = vcombine.low %v75, %v82
    %v84 = vcombine.high %v75, %v82
    %v87 = vadd.f32 %v83, %v84
    %88 = vadd.xlane.f32.xlu0 %v87
    %v89 = vpop.xlane.xlu0 %88
    %v90 = vcombine.high %v55, %v57
    %v91 = vcombine.high %v59, %v61
    %v93 = vunpack.c.l.s4 1983009808
    %v94 = vunpack.c.0.s8 %v93
    %v95 = vlaneseq
    %v96 = vshrl.u32 %v95, 7
    %v97 = vsub.s32 %v94, %v96
    %v98 = vrot.slane %v90, %v97
    %v100 = vunpack.c.l.s4 1983009808
    %v101 = vunpack.c.0.s8 %v100
    %v102 = vlaneseq
    %v103 = vshrl.u32 %v102, 7
    %v104 = vsub.s32 %v101, %v103
    %v105 = vrot.slane %v91, %v104
    %v106 = vcombine.low %v98, %v105
    %v107 = vcombine.high %v98, %v105
    %v110 = vadd.f32 %v106, %v107
    %111 = vadd.xlane.f32.xlu0 %v110
    %v112 = vpop.xlane.xlu0 %111
    %v117 = vcombine.low %v56, %v58
    %v118 = vcombine.low %v60, %v62
    %v120 = vunpack.c.l.s4 1983009808
    %v121 = vunpack.c.0.s8 %v120
    %v122 = vlaneseq
    %v123 = vshrl.u32 %v122, 7
    %v124 = vsub.s32 %v121, %v123
    %v125 = vrot.slane %v117, %v124
    %v127 = vunpack.c.l.s4 1983009808
    %v128 = vunpack.c.0.s8 %v127
    %v129 = vlaneseq
    %v130 = vshrl.u32 %v129, 7
    %v131 = vsub.s32 %v128, %v130
    %v132 = vrot.slane %v118, %v131
    %v133 = vcombine.low %v125, %v132
    %v134 = vcombine.high %v125, %v132
    %v137 = vadd.f32 %v133, %v134
    %138 = vadd.xlane.f32.xlu0 %v137
    %v139 = vpop.xlane.xlu0 %138
    %v140 = vcombine.high %v56, %v58
    %v141 = vcombine.high %v60, %v62
    %v143 = vunpack.c.l.s4 1983009808
    %v144 = vunpack.c.0.s8 %v143
    %v145 = vlaneseq
    %v146 = vshrl.u32 %v145, 7
    %v147 = vsub.s32 %v144, %v146
    %v148 = vrot.slane %v140, %v147
    %v150 = vunpack.c.l.s4 1983009808
    %v151 = vunpack.c.0.s8 %v150
    %v152 = vlaneseq
    %v153 = vshrl.u32 %v152, 7
    %v154 = vsub.s32 %v151, %v153
    %v155 = vrot.slane %v141, %v154
    %v156 = vcombine.low %v148, %v155
    %v157 = vcombine.high %v148, %v155
    %v160 = vadd.f32 %v156, %v157
    %161 = vadd.xlane.f32.xlu0 %v160
    %v162 = vpop.xlane.xlu0 %161
    %vm163 = vcmask 7168
    %v164 = vsel %vm163, %v89, %v112
    %vm165 = vcmask 15360
    %v166 = vsel %vm165, %v164, %v139
    %vm167 = vcmask 23552
    %v168 = vsel %vm167, %v166, %v162
    %vm169 = vcmask 31744
    %v170 = vsel %vm169, %v168, 0.0
    %v171 = vpack.c.bf16 %v170, %v170
    %v172 = vld [vmem:[#allocation5] sm:$0xff]
    %v173 = vld [vmem:[#allocation5 + $0x8] sm:$0xff]
    %v174 = vld [vmem:[#allocation5 + $0x10] sm:$0xff]
    %v175 = vld [vmem:[#allocation5 + $0x18] sm:$0xff]
    %v176 = vld [vmem:[#allocation5 + $0x20] sm:$0xff]
    %v177 = vld [vmem:[#allocation5 + $0x28] sm:$0xff]
    %v178 = vld [vmem:[#allocation5 + $0x30] sm:$0xff]
    %v179 = vld [vmem:[#allocation5 + $0x38] sm:$0xff]
    %v188 = vunpack.c.l.b16 %v172
    %v189 = vunpack.c.h.b16 %v172
    %v190 = vunpack.c.l.b16 %v173
    %v191 = vunpack.c.h.b16 %v173
    %v192 = vunpack.c.l.b16 %v174
    %v193 = vunpack.c.h.b16 %v174
    %v194 = vunpack.c.l.b16 %v175
    %v195 = vunpack.c.h.b16 %v175
    %v196 = vunpack.c.l.b16 %v176
    %v197 = vunpack.c.h.b16 %v176
    %v198 = vunpack.c.l.b16 %v177
    %v199 = vunpack.c.h.b16 %v177
    %v200 = vunpack.c.l.b16 %v178
    %v201 = vunpack.c.h.b16 %v178
    %v202 = vunpack.c.l.b16 %v179
    %v203 = vunpack.c.h.b16 %v179
    %v204 = vpack.c.b16 %v188, %v188
    %v205 = vpack.c.b16 %v189, %v189
    %v206 = vpack.c.b16 %v190, %v190
    %v207 = vpack.c.b16 %v191, %v191
    %v208 = vpack.c.b16 %v192, %v192
    %v209 = vpack.c.b16 %v193, %v193
    %v210 = vpack.c.b16 %v194, %v194
    %v211 = vpack.c.b16 %v195, %v195
    %v212 = vpack.c.b16 %v196, %v196
    %v213 = vpack.c.b16 %v197, %v197
    %v214 = vpack.c.b16 %v198, %v198
    %v215 = vpack.c.b16 %v199, %v199
    %v216 = vpack.c.b16 %v200, %v200
    %v217 = vpack.c.b16 %v201, %v201
    %v218 = vpack.c.b16 %v202, %v202
    %v219 = vpack.c.b16 %v203, %v203
    %vm220 = vcmask 64512
    %v222 = vsel %vm220, %v171, 0
    %vm224 = vcmask 1043456
    %v226 = vsel %vm224, %v204, 0
    %v229 = vsel %vm224, %v205, 0
    %v232 = vsel %vm224, %v206, 0
    %v235 = vsel %vm224, %v207, 0
    %v238 = vsel %vm224, %v208, 0
    %v241 = vsel %vm224, %v209, 0
    %v244 = vsel %vm224, %v210, 0
    %v247 = vsel %vm224, %v211, 0
    %v250 = vsel %vm224, %v212, 0
    %v253 = vsel %vm224, %v213, 0
    %v256 = vsel %vm224, %v214, 0
    %v259 = vsel %vm224, %v215, 0
    %v262 = vsel %vm224, %v216, 0
    %v265 = vsel %vm224, %v217, 0
    %v268 = vsel %vm224, %v218, 0
    %v271 = vsel %vm224, %v219, 0
    %273 = vmatprep.subr.bf16.mxu0 0
    %274 = vmatpush1.bf16.msra.mxu0 0
    %275 = vmatprep.subr.bf16.mxu0 0
    %276 = vmatpush1.bf16.msra.mxu0 0
    %277 = vmatprep.subr.bf16.mxu0 0
    %278 = vmatpush1.bf16.msra.mxu0 0
    %279 = vmatprep.subr.bf16.mxu0 0
    %280 = vmatpush1.bf16.msra.mxu0 0
    %281 = vmatprep.subr.bf16.mxu0 0
    %282 = vmatpush1.bf16.msra.mxu0 0
    %283 = vmatprep.subr.bf16.mxu0 0
    %284 = vmatpush1.bf16.msra.mxu0 0
    %285 = vmatprep.subr.bf16.mxu0 0
    %286 = vmatpush1.bf16.msra.mxu0 0
    %287 = vmatprep.subr.bf16.mxu0 %v229
    %288 = vmatpush1.bf16.msra.mxu0 %v226
    %289 = vmatprep.subr.bf16.mxu0 0
    %290 = vmatpush2.bf16.msra.mxu0 0
    %291 = vmatprep.subr.bf16.mxu0 0
    %292 = vmatpush2.bf16.msra.mxu0 0
    %293 = vmatprep.subr.bf16.mxu0 0
    %294 = vmatpush2.bf16.msra.mxu0 0
    %295 = vmatprep.subr.bf16.mxu0 0
    %296 = vmatpush2.bf16.msra.mxu0 0
    %297 = vmatprep.subr.bf16.mxu0 0
    %298 = vmatpush2.bf16.msra.mxu0 0
    %299 = vmatprep.subr.bf16.mxu0 0
    %300 = vmatpush2.bf16.msra.mxu0 0
    %301 = vmatprep.subr.bf16.mxu0 0
    %302 = vmatpush2.bf16.msra.mxu0 0
    %303 = vmatprep.subr.bf16.mxu0 0
    %304 = vmatpush2.bf16.msra.mxu0 0
    %305 = vmatprep.mubr.bf16.mxu0 0
    %306 = vmatmul.mubr.bf16.gmra.mxu0 %v222
    %v307 = vpop.f32.mrf.mxu0
    %v308 = vadd.f32 0.0, %v307
    %v309 = vpop.f32.mrf.mxu0
    %v310 = vadd.f32 0.0, %v309
    %v311 = vpop.f32.mrf.mxu0
    %v312 = vpop.f32.mrf.mxu0
    %313 = vdwg.mxu0
    %314 = vmatprep.subr.bf16.mxu0 0
    %315 = vmatpush1.bf16.msra.mxu0 0
    %316 = vmatprep.subr.bf16.mxu0 0
    %317 = vmatpush1.bf16.msra.mxu0 0
    %318 = vmatprep.subr.bf16.mxu0 0
    %319 = vmatpush1.bf16.msra.mxu0 0
    %320 = vmatprep.subr.bf16.mxu0 0
    %321 = vmatpush1.bf16.msra.mxu0 0
    %322 = vmatprep.subr.bf16.mxu0 0
    %323 = vmatpush1.bf16.msra.mxu0 0
    %324 = vmatprep.subr.bf16.mxu0 0
    %325 = vmatpush1.bf16.msra.mxu0 0
    %326 = vmatprep.subr.bf16.mxu0 0
    %327 = vmatpush1.bf16.msra.mxu0 0
    %328 = vmatprep.subr.bf16.mxu0 %v235
    %329 = vmatpush1.bf16.msra.mxu0 %v232
    %330 = vmatprep.subr.bf16.mxu0 0
    %331 = vmatpush2.bf16.msra.mxu0 0
    %332 = vmatprep.subr.bf16.mxu0 0
    %333 = vmatpush2.bf16.msra.mxu0 0
    %334 = vmatprep.subr.bf16.mxu0 0
    %335 = vmatpush2.bf16.msra.mxu0 0
    %336 = vmatprep.subr.bf16.mxu0 0
    %337 = vmatpush2.bf16.msra.mxu0 0
    %338 = vmatprep.subr.bf16.mxu0 0
    %339 = vmatpush2.bf16.msra.mxu0 0
    %340 = vmatprep.subr.bf16.mxu0 0
    %341 = vmatpush2.bf16.msra.mxu0 0
    %342 = vmatprep.subr.bf16.mxu0 0
    %343 = vmatpush2.bf16.msra.mxu0 0
    %344 = vmatprep.subr.bf16.mxu0 0
    %345 = vmatpush2.bf16.msra.mxu0 0
    %346 = vmatprep.mubr.bf16.mxu0 0
    %347 = vmatmul.mubr.bf16.gmra.mxu0 %v222
    %v348 = vpop.f32.mrf.mxu0
    %v349 = vadd.f32 0.0, %v348
    %v350 = vpop.f32.mrf.mxu0
    %v351 = vadd.f32 0.0, %v350
    %v352 = vpop.f32.mrf.mxu0
    %v353 = vpop.f32.mrf.mxu0
    %354 = vdwg.mxu0
    %355 = vmatprep.subr.bf16.mxu0 0
    %356 = vmatpush1.bf16.msra.mxu0 0
    %357 = vmatprep.subr.bf16.mxu0 0
    %358 = vmatpush1.bf16.msra.mxu0 0
    %359 = vmatprep.subr.bf16.mxu0 0
    %360 = vmatpush1.bf16.msra.mxu0 0
    %361 = vmatprep.subr.bf16.mxu0 0
    %362 = vmatpush1.bf16.msra.mxu0 0
    %363 = vmatprep.subr.bf16.mxu0 0
    %364 = vmatpush1.bf16.msra.mxu0 0
    %365 = vmatprep.subr.bf16.mxu0 0
    %366 = vmatpush1.bf16.msra.mxu0 0
    %367 = vmatprep.subr.bf16.mxu0 0
    %368 = vmatpush1.bf16.msra.mxu0 0
    %369 = vmatprep.subr.bf16.mxu0 %v241
    %370 = vmatpush1.bf16.msra.mxu0 %v238
    %371 = vmatprep.subr.bf16.mxu0 0
    %372 = vmatpush2.bf16.msra.mxu0 0
    %373 = vmatprep.subr.bf16.mxu0 0
    %374 = vmatpush2.bf16.msra.mxu0 0
    %375 = vmatprep.subr.bf16.mxu0 0
    %376 = vmatpush2.bf16.msra.mxu0 0
    %377 = vmatprep.subr.bf16.mxu0 0
    %378 = vmatpush2.bf16.msra.mxu0 0
    %379 = vmatprep.subr.bf16.mxu0 0
    %380 = vmatpush2.bf16.msra.mxu0 0
    %381 = vmatprep.subr.bf16.mxu0 0
    %382 = vmatpush2.bf16.msra.mxu0 0
    %383 = vmatprep.subr.bf16.mxu0 0
    %384 = vmatpush2.bf16.msra.mxu0 0
    %385 = vmatprep.subr.bf16.mxu0 0
    %386 = vmatpush2.bf16.msra.mxu0 0
    %387 = vmatprep.mubr.bf16.mxu0 0
    %388 = vmatmul.mubr.bf16.gmra.mxu0 %v222
    %v389 = vpop.f32.mrf.mxu0
    %v390 = vadd.f32 0.0, %v389
    %v391 = vpop.f32.mrf.mxu0
    %v392 = vadd.f32 0.0, %v391
    %v393 = vpop.f32.mrf.mxu0
    %v394 = vpop.f32.mrf.mxu0
    %395 = vdwg.mxu0
    %396 = vmatprep.subr.bf16.mxu0 0
    %397 = vmatpush1.bf16.msra.mxu0 0
    %398 = vmatprep.subr.bf16.mxu0 0
    %399 = vmatpush1.bf16.msra.mxu0 0
    %400 = vmatprep.subr.bf16.mxu0 0
    %401 = vmatpush1.bf16.msra.mxu0 0
    %402 = vmatprep.subr.bf16.mxu0 0
    %403 = vmatpush1.bf16.msra.mxu0 0
    %404 = vmatprep.subr.bf16.mxu0 0
    %405 = vmatpush1.bf16.msra.mxu0 0
    %406 = vmatprep.subr.bf16.mxu0 0
    %407 = vmatpush1.bf16.msra.mxu0 0
    %408 = vmatprep.subr.bf16.mxu0 0
    %409 = vmatpush1.bf16.msra.mxu0 0
    %410 = vmatprep.subr.bf16.mxu0 %v247
    %411 = vmatpush1.bf16.msra.mxu0 %v244
    %412 = vmatprep.subr.bf16.mxu0 0
    %413 = vmatpush2.bf16.msra.mxu0 0
    %414 = vmatprep.subr.bf16.mxu0 0
    %415 = vmatpush2.bf16.msra.mxu0 0
    %416 = vmatprep.subr.bf16.mxu0 0
    %417 = vmatpush2.bf16.msra.mxu0 0
    %418 = vmatprep.subr.bf16.mxu0 0
    %419 = vmatpush2.bf16.msra.mxu0 0
    %420 = vmatprep.subr.bf16.mxu0 0
    %421 = vmatpush2.bf16.msra.mxu0 0
    %422 = vmatprep.subr.bf16.mxu0 0
    %423 = vmatpush2.bf16.msra.mxu0 0
    %424 = vmatprep.subr.bf16.mxu0 0
    %425 = vmatpush2.bf16.msra.mxu0 0
    %426 = vmatprep.subr.bf16.mxu0 0
    %427 = vmatpush2.bf16.msra.mxu0 0
    %428 = vmatprep.mubr.bf16.mxu0 0
    %429 = vmatmul.mubr.bf16.gmra.mxu0 %v222
    %v430 = vpop.f32.mrf.mxu0
    %v431 = vadd.f32 0.0, %v430
    %v432 = vpop.f32.mrf.mxu0
    %v433 = vadd.f32 0.0, %v432
    %v434 = vpop.f32.mrf.mxu0
    %v435 = vpop.f32.mrf.mxu0
    %436 = vdwg.mxu0
    %437 = vmatprep.subr.bf16.mxu0 0
    %438 = vmatpush1.bf16.msra.mxu0 0
    %439 = vmatprep.subr.bf16.mxu0 0
    %440 = vmatpush1.bf16.msra.mxu0 0
    %441 = vmatprep.subr.bf16.mxu0 0
    %442 = vmatpush1.bf16.msra.mxu0 0
    %443 = vmatprep.subr.bf16.mxu0 0
    %444 = vmatpush1.bf16.msra.mxu0 0
    %445 = vmatprep.subr.bf16.mxu0 0
    %446 = vmatpush1.bf16.msra.mxu0 0
    %447 = vmatprep.subr.bf16.mxu0 0
    %448 = vmatpush1.bf16.msra.mxu0 0
    %449 = vmatprep.subr.bf16.mxu0 0
    %450 = vmatpush1.bf16.msra.mxu0 0
    %451 = vmatprep.subr.bf16.mxu0 %v253
    %452 = vmatpush1.bf16.msra.mxu0 %v250
    %453 = vmatprep.subr.bf16.mxu0 0
    %454 = vmatpush2.bf16.msra.mxu0 0
    %455 = vmatprep.subr.bf16.mxu0 0
    %456 = vmatpush2.bf16.msra.mxu0 0
    %457 = vmatprep.subr.bf16.mxu0 0
    %458 = vmatpush2.bf16.msra.mxu0 0
    %459 = vmatprep.subr.bf16.mxu0 0
    %460 = vmatpush2.bf16.msra.mxu0 0
    %461 = vmatprep.subr.bf16.mxu0 0
    %462 = vmatpush2.bf16.msra.mxu0 0
    %463 = vmatprep.subr.bf16.mxu0 0
    %464 = vmatpush2.bf16.msra.mxu0 0
    %465 = vmatprep.subr.bf16.mxu0 0
    %466 = vmatpush2.bf16.msra.mxu0 0
    %467 = vmatprep.subr.bf16.mxu0 0
    %468 = vmatpush2.bf16.msra.mxu0 0
    %469 = vmatprep.mubr.bf16.mxu0 0
    %470 = vmatmul.mubr.bf16.gmra.mxu0 %v222
    %v471 = vpop.f32.mrf.mxu0
    %v472 = vadd.f32 0.0, %v471
    %v473 = vpop.f32.mrf.mxu0
    %v474 = vadd.f32 0.0, %v473
    %v475 = vpop.f32.mrf.mxu0
    %v476 = vpop.f32.mrf.mxu0
    %477 = vdwg.mxu0
    %478 = vmatprep.subr.bf16.mxu0 0
    %479 = vmatpush1.bf16.msra.mxu0 0
    %480 = vmatprep.subr.bf16.mxu0 0
    %481 = vmatpush1.bf16.msra.mxu0 0
    %482 = vmatprep.subr.bf16.mxu0 0
    %483 = vmatpush1.bf16.msra.mxu0 0
    %484 = vmatprep.subr.bf16.mxu0 0
    %485 = vmatpush1.bf16.msra.mxu0 0
    %486 = vmatprep.subr.bf16.mxu0 0
    %487 = vmatpush1.bf16.msra.mxu0 0
    %488 = vmatprep.subr.bf16.mxu0 0
    %489 = vmatpush1.bf16.msra.mxu0 0
    %490 = vmatprep.subr.bf16.mxu0 0
    %491 = vmatpush1.bf16.msra.mxu0 0
    %492 = vmatprep.subr.bf16.mxu0 %v259
    %493 = vmatpush1.bf16.msra.mxu0 %v256
    %494 = vmatprep.subr.bf16.mxu0 0
    %495 = vmatpush2.bf16.msra.mxu0 0
    %496 = vmatprep.subr.bf16.mxu0 0
    %497 = vmatpush2.bf16.msra.mxu0 0
    %498 = vmatprep.subr.bf16.mxu0 0
    %499 = vmatpush2.bf16.msra.mxu0 0
    %500 = vmatprep.subr.bf16.mxu0 0
    %501 = vmatpush2.bf16.msra.mxu0 0
    %502 = vmatprep.subr.bf16.mxu0 0
    %503 = vmatpush2.bf16.msra.mxu0 0
    %504 = vmatprep.subr.bf16.mxu0 0
    %505 = vmatpush2.bf16.msra.mxu0 0
    %506 = vmatprep.subr.bf16.mxu0 0
    %507 = vmatpush2.bf16.msra.mxu0 0
    %508 = vmatprep.subr.bf16.mxu0 0
    %509 = vmatpush2.bf16.msra.mxu0 0
    %510 = vmatprep.mubr.bf16.mxu0 0
    %511 = vmatmul.mubr.bf16.gmra.mxu0 %v222
    %v512 = vpop.f32.mrf.mxu0
    %v513 = vadd.f32 0.0, %v512
    %v514 = vpop.f32.mrf.mxu0
    %v515 = vadd.f32 0.0, %v514
    %v516 = vpop.f32.mrf.mxu0
    %v517 = vpop.f32.mrf.mxu0
    %518 = vdwg.mxu0
    %519 = vmatprep.subr.bf16.mxu0 0
    %520 = vmatpush1.bf16.msra.mxu0 0
    %521 = vmatprep.subr.bf16.mxu0 0
    %522 = vmatpush1.bf16.msra.mxu0 0
    %523 = vmatprep.subr.bf16.mxu0 0
    %524 = vmatpush1.bf16.msra.mxu0 0
    %525 = vmatprep.subr.bf16.mxu0 0
    %526 = vmatpush1.bf16.msra.mxu0 0
    %527 = vmatprep.subr.bf16.mxu0 0
    %528 = vmatpush1.bf16.msra.mxu0 0
    %529 = vmatprep.subr.bf16.mxu0 0
    %530 = vmatpush1.bf16.msra.mxu0 0
    %531 = vmatprep.subr.bf16.mxu0 0
    %532 = vmatpush1.bf16.msra.mxu0 0
    %533 = vmatprep.subr.bf16.mxu0 %v265
    %534 = vmatpush1.bf16.msra.mxu0 %v262
    %535 = vmatprep.subr.bf16.mxu0 0
    %536 = vmatpush2.bf16.msra.mxu0 0
    %537 = vmatprep.subr.bf16.mxu0 0
    %538 = vmatpush2.bf16.msra.mxu0 0
    %539 = vmatprep.subr.bf16.mxu0 0
    %540 = vmatpush2.bf16.msra.mxu0 0
    %541 = vmatprep.subr.bf16.mxu0 0
    %542 = vmatpush2.bf16.msra.mxu0 0
    %543 = vmatprep.subr.bf16.mxu0 0
    %544 = vmatpush2.bf16.msra.mxu0 0
    %545 = vmatprep.subr.bf16.mxu0 0
    %546 = vmatpush2.bf16.msra.mxu0 0
    %547 = vmatprep.subr.bf16.mxu0 0
    %548 = vmatpush2.bf16.msra.mxu0 0
    %549 = vmatprep.subr.bf16.mxu0 0
    %550 = vmatpush2.bf16.msra.mxu0 0
    %551 = vmatprep.mubr.bf16.mxu0 0
    %552 = vmatmul.mubr.bf16.gmra.mxu0 %v222
    %v553 = vpop.f32.mrf.mxu0
    %v554 = vadd.f32 0.0, %v553
    %v555 = vpop.f32.mrf.mxu0
    %v556 = vadd.f32 0.0, %v555
    %v557 = vpop.f32.mrf.mxu0
    %v558 = vpop.f32.mrf.mxu0
    %559 = vdwg.mxu0
    %560 = vmatprep.subr.bf16.mxu0 0
    %561 = vmatpush1.bf16.msra.mxu0 0
    %562 = vmatprep.subr.bf16.mxu0 0
    %563 = vmatpush1.bf16.msra.mxu0 0
    %564 = vmatprep.subr.bf16.mxu0 0
    %565 = vmatpush1.bf16.msra.mxu0 0
    %566 = vmatprep.subr.bf16.mxu0 0
    %567 = vmatpush1.bf16.msra.mxu0 0
    %568 = vmatprep.subr.bf16.mxu0 0
    %569 = vmatpush1.bf16.msra.mxu0 0
    %570 = vmatprep.subr.bf16.mxu0 0
    %571 = vmatpush1.bf16.msra.mxu0 0
    %572 = vmatprep.subr.bf16.mxu0 0
    %573 = vmatpush1.bf16.msra.mxu0 0
    %574 = vmatprep.subr.bf16.mxu0 %v271
    %575 = vmatpush1.bf16.msra.mxu0 %v268
    %576 = vmatprep.subr.bf16.mxu0 0
    %577 = vmatpush2.bf16.msra.mxu0 0
    %578 = vmatprep.subr.bf16.mxu0 0
    %579 = vmatpush2.bf16.msra.mxu0 0
    %580 = vmatprep.subr.bf16.mxu0 0
    %581 = vmatpush2.bf16.msra.mxu0 0
    %582 = vmatprep.subr.bf16.mxu0 0
    %583 = vmatpush2.bf16.msra.mxu0 0
    %584 = vmatprep.subr.bf16.mxu0 0
    %585 = vmatpush2.bf16.msra.mxu0 0
    %586 = vmatprep.subr.bf16.mxu0 0
    %587 = vmatpush2.bf16.msra.mxu0 0
    %588 = vmatprep.subr.bf16.mxu0 0
    %589 = vmatpush2.bf16.msra.mxu0 0
    %590 = vmatprep.subr.bf16.mxu0 0
    %591 = vmatpush2.bf16.msra.mxu0 0
    %592 = vmatprep.mubr.bf16.mxu0 0
    %593 = vmatmul.mubr.bf16.gmra.mxu0 %v222
    %v594 = vpop.f32.mrf.mxu0
    %v595 = vadd.f32 0.0, %v594
    %v596 = vpop.f32.mrf.mxu0
    %v597 = vadd.f32 0.0, %v596
    %v598 = vpop.f32.mrf.mxu0
    %v599 = vpop.f32.mrf.mxu0
    %600 = vdwg.mxu0
    %v601 = vmax.f32 %v308, 0.0
    %v602 = vmax.f32 %v310, 0.0
    %v603 = vmax.f32 %v349, 0.0
    %v604 = vmax.f32 %v351, 0.0
    %v605 = vmax.f32 %v390, 0.0
    %v606 = vmax.f32 %v392, 0.0
    %v607 = vmax.f32 %v431, 0.0
    %v608 = vmax.f32 %v433, 0.0
    %v609 = vmax.f32 %v472, 0.0
    %v610 = vmax.f32 %v474, 0.0
    %v611 = vmax.f32 %v513, 0.0
    %v612 = vmax.f32 %v515, 0.0
    %v613 = vmax.f32 %v554, 0.0
    %v614 = vmax.f32 %v556, 0.0
    %v615 = vmax.f32 %v595, 0.0
    %v616 = vmax.f32 %v597, 0.0
    %v617 = vpack.c.bf16 %v601, %v601
    %v618 = vpack.c.bf16 %v602, %v602
    %v619 = vpack.c.bf16 %v603, %v603
    %v620 = vpack.c.bf16 %v604, %v604
    %v621 = vpack.c.bf16 %v605, %v605
    %v622 = vpack.c.bf16 %v606, %v606
    %v623 = vpack.c.bf16 %v607, %v607
    %v624 = vpack.c.bf16 %v608, %v608
    %v625 = vpack.c.bf16 %v609, %v609
    %v626 = vpack.c.bf16 %v610, %v610
    %v627 = vpack.c.bf16 %v611, %v611
    %v628 = vpack.c.bf16 %v612, %v612
    %v629 = vpack.c.bf16 %v613, %v613
    %v630 = vpack.c.bf16 %v614, %v614
    %v631 = vpack.c.bf16 %v615, %v615
    %v632 = vpack.c.bf16 %v616, %v616
    %v633 = vld [vmem:[#allocation7] sm:$0xf]
    %v634 = vld [vmem:[#allocation7 + $0x4] sm:$0xf]
    %v635 = vld [vmem:[#allocation7 + $0x8] sm:$0xf]
    %v636 = vld [vmem:[#allocation7 + $0xc] sm:$0xf]
    %v637 = vld [vmem:[#allocation7 + $0x10] sm:$0xf]
    %v638 = vld [vmem:[#allocation7 + $0x14] sm:$0xf]
    %v639 = vld [vmem:[#allocation7 + $0x18] sm:$0xf]
    %v640 = vld [vmem:[#allocation7 + $0x1c] sm:$0xf]
    %v641 = vld [vmem:[#allocation7 + $0x20] sm:$0xf]
    %v642 = vld [vmem:[#allocation7 + $0x24] sm:$0xf]
    %v643 = vld [vmem:[#allocation7 + $0x28] sm:$0xf]
    %v644 = vld [vmem:[#allocation7 + $0x2c] sm:$0xf]
    %v645 = vld [vmem:[#allocation7 + $0x30] sm:$0xf]
    %v646 = vld [vmem:[#allocation7 + $0x34] sm:$0xf]
    %v647 = vld [vmem:[#allocation7 + $0x38] sm:$0xf]
    %v648 = vld [vmem:[#allocation7 + $0x3c] sm:$0xf]
    %v649 = vld [vmem:[#allocation7 + $0x40] sm:$0xf]
    %v650 = vld [vmem:[#allocation7 + $0x44] sm:$0xf]
    %v651 = vld [vmem:[#allocation7 + $0x48] sm:$0xf]
    %v652 = vld [vmem:[#allocation7 + $0x4c] sm:$0xf]
    %v653 = vld [vmem:[#allocation7 + $0x50] sm:$0xf]
    %v654 = vld [vmem:[#allocation7 + $0x54] sm:$0xf]
    %v655 = vld [vmem:[#allocation7 + $0x58] sm:$0xf]
    %v656 = vld [vmem:[#allocation7 + $0x5c] sm:$0xf]
    %v657 = vld [vmem:[#allocation7 + $0x60] sm:$0xf]
    %v658 = vld [vmem:[#allocation7 + $0x64] sm:$0xf]
    %v659 = vld [vmem:[#allocation7 + $0x68] sm:$0xf]
    %v660 = vld [vmem:[#allocation7 + $0x6c] sm:$0xf]
    %v661 = vld [vmem:[#allocation7 + $0x70] sm:$0xf]
    %v662 = vld [vmem:[#allocation7 + $0x74] sm:$0xf]
    %v663 = vld [vmem:[#allocation7 + $0x78] sm:$0xf]
    %v664 = vld [vmem:[#allocation7 + $0x7c] sm:$0xf]
    %v665 = vld [vmem:[#allocation7 + $0x80] sm:$0xf]
    %v666 = vld [vmem:[#allocation7 + $0x84] sm:$0xf]
    %v667 = vld [vmem:[#allocation7 + $0x88] sm:$0xf]
    %v668 = vld [vmem:[#allocation7 + $0x8c] sm:$0xf]
    %v669 = vld [vmem:[#allocation7 + $0x90] sm:$0xf]
    %v670 = vld [vmem:[#allocation7 + $0x94] sm:$0xf]
    %v671 = vld [vmem:[#allocation7 + $0x98] sm:$0xf]
    %v672 = vld [vmem:[#allocation7 + $0x9c] sm:$0xf]
    %v673 = vld [vmem:[#allocation7 + $0xa0] sm:$0xf]
    %v674 = vld [vmem:[#allocation7 + $0xa4] sm:$0xf]
    %v675 = vld [vmem:[#allocation7 + $0xa8] sm:$0xf]
    %v676 = vld [vmem:[#allocation7 + $0xac] sm:$0xf]
    %v677 = vld [vmem:[#allocation7 + $0xb0] sm:$0xf]
    %v678 = vld [vmem:[#allocation7 + $0xb4] sm:$0xf]
    %v679 = vld [vmem:[#allocation7 + $0xb8] sm:$0xf]
    %v680 = vld [vmem:[#allocation7 + $0xbc] sm:$0xf]
    %v681 = vld [vmem:[#allocation7 + $0xc0] sm:$0xf]
    %v682 = vld [vmem:[#allocation7 + $0xc4] sm:$0xf]
    %v683 = vld [vmem:[#allocation7 + $0xc8] sm:$0xf]
    %v684 = vld [vmem:[#allocation7 + $0xcc] sm:$0xf]
    %v685 = vld [vmem:[#allocation7 + $0xd0] sm:$0xf]
    %v686 = vld [vmem:[#allocation7 + $0xd4] sm:$0xf]
    %v687 = vld [vmem:[#allocation7 + $0xd8] sm:$0xf]
    %v688 = vld [vmem:[#allocation7 + $0xdc] sm:$0xf]
    %v689 = vld [vmem:[#allocation7 + $0xe0] sm:$0xf]
    %v690 = vld [vmem:[#allocation7 + $0xe4] sm:$0xf]
    %v691 = vld [vmem:[#allocation7 + $0xe8] sm:$0xf]
    %v692 = vld [vmem:[#allocation7 + $0xec] sm:$0xf]
    %v693 = vld [vmem:[#allocation7 + $0xf0] sm:$0xf]
    %v694 = vld [vmem:[#allocation7 + $0xf4] sm:$0xf]
    %v695 = vld [vmem:[#allocation7 + $0xf8] sm:$0xf]
    %v696 = vld [vmem:[#allocation7 + $0xfc] sm:$0xf]
    %v697 = vld [vmem:[#allocation7 + $0x100] sm:$0xf]
    %v698 = vld [vmem:[#allocation7 + $0x104] sm:$0xf]
    %v699 = vld [vmem:[#allocation7 + $0x108] sm:$0xf]
    %v700 = vld [vmem:[#allocation7 + $0x10c] sm:$0xf]
    %v701 = vld [vmem:[#allocation7 + $0x110] sm:$0xf]
    %v702 = vld [vmem:[#allocation7 + $0x114] sm:$0xf]
    %v703 = vld [vmem:[#allocation7 + $0x118] sm:$0xf]
    %v704 = vld [vmem:[#allocation7 + $0x11c] sm:$0xf]
    %v705 = vld [vmem:[#allocation7 + $0x120] sm:$0xf]
    %v706 = vld [vmem:[#allocation7 + $0x124] sm:$0xf]
    %v707 = vld [vmem:[#allocation7 + $0x128] sm:$0xf]
    %v708 = vld [vmem:[#allocation7 + $0x12c] sm:$0xf]
    %v709 = vld [vmem:[#allocation7 + $0x130] sm:$0xf]
    %v710 = vld [vmem:[#allocation7 + $0x134] sm:$0xf]
    %v711 = vld [vmem:[#allocation7 + $0x138] sm:$0xf]
    %v712 = vld [vmem:[#allocation7 + $0x13c] sm:$0xf]
    %v713 = vld [vmem:[#allocation7 + $0x140] sm:$0xf]
    %v714 = vld [vmem:[#allocation7 + $0x144] sm:$0xf]
    %v715 = vld [vmem:[#allocation7 + $0x148] sm:$0xf]
    %v716 = vld [vmem:[#allocation7 + $0x14c] sm:$0xf]
    %v717 = vld [vmem:[#allocation7 + $0x150] sm:$0xf]
    %v718 = vld [vmem:[#allocation7 + $0x154] sm:$0xf]
    %v719 = vld [vmem:[#allocation7 + $0x158] sm:$0xf]
    %v720 = vld [vmem:[#allocation7 + $0x15c] sm:$0xf]
    %v721 = vld [vmem:[#allocation7 + $0x160] sm:$0xf]
    %v722 = vld [vmem:[#allocation7 + $0x164] sm:$0xf]
    %v723 = vld [vmem:[#allocation7 + $0x168] sm:$0xf]
    %v724 = vld [vmem:[#allocation7 + $0x16c] sm:$0xf]
    %v725 = vld [vmem:[#allocation7 + $0x170] sm:$0xf]
    %v726 = vld [vmem:[#allocation7 + $0x174] sm:$0xf]
    %v727 = vld [vmem:[#allocation7 + $0x178] sm:$0xf]
    %v728 = vld [vmem:[#allocation7 + $0x17c] sm:$0xf]
    %v729 = vld [vmem:[#allocation7 + $0x180] sm:$0xf]
    %v730 = vld [vmem:[#allocation7 + $0x184] sm:$0xf]
    %v731 = vld [vmem:[#allocation7 + $0x188] sm:$0xf]
    %v732 = vld [vmem:[#allocation7 + $0x18c] sm:$0xf]
    %v733 = vld [vmem:[#allocation7 + $0x190] sm:$0xf]
    %v734 = vld [vmem:[#allocation7 + $0x194] sm:$0xf]
    %v735 = vld [vmem:[#allocation7 + $0x198] sm:$0xf]
    %v736 = vld [vmem:[#allocation7 + $0x19c] sm:$0xf]
    %v737 = vld [vmem:[#allocation7 + $0x1a0] sm:$0xf]
    %v738 = vld [vmem:[#allocation7 + $0x1a4] sm:$0xf]
    %v739 = vld [vmem:[#allocation7 + $0x1a8] sm:$0xf]
    %v740 = vld [vmem:[#allocation7 + $0x1ac] sm:$0xf]
    %v741 = vld [vmem:[#allocation7 + $0x1b0] sm:$0xf]
    %v742 = vld [vmem:[#allocation7 + $0x1b4] sm:$0xf]
    %v743 = vld [vmem:[#allocation7 + $0x1b8] sm:$0xf]
    %v744 = vld [vmem:[#allocation7 + $0x1bc] sm:$0xf]
    %v745 = vld [vmem:[#allocation7 + $0x1c0] sm:$0xf]
    %v746 = vld [vmem:[#allocation7 + $0x1c4] sm:$0xf]
    %v747 = vld [vmem:[#allocation7 + $0x1c8] sm:$0xf]
    %v748 = vld [vmem:[#allocation7 + $0x1cc] sm:$0xf]
    %v749 = vld [vmem:[#allocation7 + $0x1d0] sm:$0xf]
    %v750 = vld [vmem:[#allocation7 + $0x1d4] sm:$0xf]
    %v751 = vld [vmem:[#allocation7 + $0x1d8] sm:$0xf]
    %v752 = vld [vmem:[#allocation7 + $0x1dc] sm:$0xf]
    %v753 = vld [vmem:[#allocation7 + $0x1e0] sm:$0xf]
    %v754 = vld [vmem:[#allocation7 + $0x1e4] sm:$0xf]
    %v755 = vld [vmem:[#allocation7 + $0x1e8] sm:$0xf]
    %v756 = vld [vmem:[#allocation7 + $0x1ec] sm:$0xf]
    %v757 = vld [vmem:[#allocation7 + $0x1f0] sm:$0xf]
    %v758 = vld [vmem:[#allocation7 + $0x1f4] sm:$0xf]
    %v759 = vld [vmem:[#allocation7 + $0x1f8] sm:$0xf]
    %v760 = vld [vmem:[#allocation7 + $0x1fc] sm:$0xf]
    %v761 = vld [vmem:[#allocation7 + $0x200] sm:$0xf]
    %v762 = vld [vmem:[#allocation7 + $0x204] sm:$0xf]
    %v763 = vld [vmem:[#allocation7 + $0x208] sm:$0xf]
    %v764 = vld [vmem:[#allocation7 + $0x20c] sm:$0xf]
    %v765 = vld [vmem:[#allocation7 + $0x210] sm:$0xf]
    %v766 = vld [vmem:[#allocation7 + $0x214] sm:$0xf]
    %v767 = vld [vmem:[#allocation7 + $0x218] sm:$0xf]
    %v768 = vld [vmem:[#allocation7 + $0x21c] sm:$0xf]
    %v769 = vld [vmem:[#allocation7 + $0x220] sm:$0xf]
    %v770 = vld [vmem:[#allocation7 + $0x224] sm:$0xf]
    %v771 = vld [vmem:[#allocation7 + $0x228] sm:$0xf]
    %v772 = vld [vmem:[#allocation7 + $0x22c] sm:$0xf]
    %v773 = vld [vmem:[#allocation7 + $0x230] sm:$0xf]
    %v774 = vld [vmem:[#allocation7 + $0x234] sm:$0xf]
    %v775 = vld [vmem:[#allocation7 + $0x238] sm:$0xf]
    %v776 = vld [vmem:[#allocation7 + $0x23c] sm:$0xf]
    %v777 = vld [vmem:[#allocation7 + $0x240] sm:$0xf]
    %v778 = vld [vmem:[#allocation7 + $0x244] sm:$0xf]
    %v779 = vld [vmem:[#allocation7 + $0x248] sm:$0xf]
    %v780 = vld [vmem:[#allocation7 + $0x24c] sm:$0xf]
    %v781 = vld [vmem:[#allocation7 + $0x250] sm:$0xf]
    %v782 = vld [vmem:[#allocation7 + $0x254] sm:$0xf]
    %v783 = vld [vmem:[#allocation7 + $0x258] sm:$0xf]
    %v784 = vld [vmem:[#allocation7 + $0x25c] sm:$0xf]
    %v785 = vld [vmem:[#allocation7 + $0x260] sm:$0xf]
    %v786 = vld [vmem:[#allocation7 + $0x264] sm:$0xf]
    %v787 = vld [vmem:[#allocation7 + $0x268] sm:$0xf]
    %v788 = vld [vmem:[#allocation7 + $0x26c] sm:$0xf]
    %v789 = vld [vmem:[#allocation7 + $0x270] sm:$0xf]
    %v790 = vld [vmem:[#allocation7 + $0x274] sm:$0xf]
    %v791 = vld [vmem:[#allocation7 + $0x278] sm:$0xf]
    %v792 = vld [vmem:[#allocation7 + $0x27c] sm:$0xf]
    %v793 = vld [vmem:[#allocation7 + $0x280] sm:$0xf]
    %v794 = vld [vmem:[#allocation7 + $0x284] sm:$0xf]
    %v795 = vld [vmem:[#allocation7 + $0x288] sm:$0xf]
    %v796 = vld [vmem:[#allocation7 + $0x28c] sm:$0xf]
    %v797 = vld [vmem:[#allocation7 + $0x290] sm:$0xf]
    %v798 = vld [vmem:[#allocation7 + $0x294] sm:$0xf]
    %v799 = vld [vmem:[#allocation7 + $0x298] sm:$0xf]
    %v800 = vld [vmem:[#allocation7 + $0x29c] sm:$0xf]
    %v801 = vld [vmem:[#allocation7 + $0x2a0] sm:$0xf]
    %v802 = vld [vmem:[#allocation7 + $0x2a4] sm:$0xf]
    %v803 = vld [vmem:[#allocation7 + $0x2a8] sm:$0xf]
    %v804 = vld [vmem:[#allocation7 + $0x2ac] sm:$0xf]
    %v805 = vld [vmem:[#allocation7 + $0x2b0] sm:$0xf]
    %v806 = vld [vmem:[#allocation7 + $0x2b4] sm:$0xf]
    %v807 = vld [vmem:[#allocation7 + $0x2b8] sm:$0xf]
    %v808 = vld [vmem:[#allocation7 + $0x2bc] sm:$0xf]
    %v809 = vld [vmem:[#allocation7 + $0x2c0] sm:$0xf]
    %v810 = vld [vmem:[#allocation7 + $0x2c4] sm:$0xf]
    %v811 = vld [vmem:[#allocation7 + $0x2c8] sm:$0xf]
    %v812 = vld [vmem:[#allocation7 + $0x2cc] sm:$0xf]
    %v813 = vld [vmem:[#allocation7 + $0x2d0] sm:$0xf]
    %v814 = vld [vmem:[#allocation7 + $0x2d4] sm:$0xf]
    %v815 = vld [vmem:[#allocation7 + $0x2d8] sm:$0xf]
    %v816 = vld [vmem:[#allocation7 + $0x2dc] sm:$0xf]
    %v817 = vld [vmem:[#allocation7 + $0x2e0] sm:$0xf]
    %v818 = vld [vmem:[#allocation7 + $0x2e4] sm:$0xf]
    %v819 = vld [vmem:[#allocation7 + $0x2e8] sm:$0xf]
    %v820 = vld [vmem:[#allocation7 + $0x2ec] sm:$0xf]
    %v821 = vld [vmem:[#allocation7 + $0x2f0] sm:$0xf]
    %v822 = vld [vmem:[#allocation7 + $0x2f4] sm:$0xf]
    %v823 = vld [vmem:[#allocation7 + $0x2f8] sm:$0xf]
    %v824 = vld [vmem:[#allocation7 + $0x2fc] sm:$0xf]
    %v825 = vld [vmem:[#allocation7 + $0x300] sm:$0xf]
    %v826 = vld [vmem:[#allocation7 + $0x304] sm:$0xf]
    %v827 = vld [vmem:[#allocation7 + $0x308] sm:$0xf]
    %v828 = vld [vmem:[#allocation7 + $0x30c] sm:$0xf]
    %v829 = vld [vmem:[#allocation7 + $0x310] sm:$0xf]
    %v830 = vld [vmem:[#allocation7 + $0x314] sm:$0xf]
    %v831 = vld [vmem:[#allocation7 + $0x318] sm:$0xf]
    %v832 = vld [vmem:[#allocation7 + $0x31c] sm:$0xf]
    %v833 = vld [vmem:[#allocation7 + $0x320] sm:$0xf]
    %v834 = vld [vmem:[#allocation7 + $0x324] sm:$0xf]
    %v835 = vld [vmem:[#allocation7 + $0x328] sm:$0xf]
    %v836 = vld [vmem:[#allocation7 + $0x32c] sm:$0xf]
    %v837 = vld [vmem:[#allocation7 + $0x330] sm:$0xf]
    %v838 = vld [vmem:[#allocation7 + $0x334] sm:$0xf]
    %v839 = vld [vmem:[#allocation7 + $0x338] sm:$0xf]
    %v840 = vld [vmem:[#allocation7 + $0x33c] sm:$0xf]
    %v841 = vld [vmem:[#allocation7 + $0x340] sm:$0xf]
    %v842 = vld [vmem:[#allocation7 + $0x344] sm:$0xf]
    %v843 = vld [vmem:[#allocation7 + $0x348] sm:$0xf]
    %v844 = vld [vmem:[#allocation7 + $0x34c] sm:$0xf]
    %v845 = vld [vmem:[#allocation7 + $0x350] sm:$0xf]
    %v846 = vld [vmem:[#allocation7 + $0x354] sm:$0xf]
    %v847 = vld [vmem:[#allocation7 + $0x358] sm:$0xf]
    %v848 = vld [vmem:[#allocation7 + $0x35c] sm:$0xf]
    %v849 = vld [vmem:[#allocation7 + $0x360] sm:$0xf]
    %v850 = vld [vmem:[#allocation7 + $0x364] sm:$0xf]
    %v851 = vld [vmem:[#allocation7 + $0x368] sm:$0xf]
    %v852 = vld [vmem:[#allocation7 + $0x36c] sm:$0xf]
    %v853 = vld [vmem:[#allocation7 + $0x370] sm:$0xf]
    %v854 = vld [vmem:[#allocation7 + $0x374] sm:$0xf]
    %v855 = vld [vmem:[#allocation7 + $0x378] sm:$0xf]
    %v856 = vld [vmem:[#allocation7 + $0x37c] sm:$0xf]
    %v857 = vld [vmem:[#allocation7 + $0x380] sm:$0xf]
    %v858 = vld [vmem:[#allocation7 + $0x384] sm:$0xf]
    %v859 = vld [vmem:[#allocation7 + $0x388] sm:$0xf]
    %v860 = vld [vmem:[#allocation7 + $0x38c] sm:$0xf]
    %v861 = vld [vmem:[#allocation7 + $0x390] sm:$0xf]
    %v862 = vld [vmem:[#allocation7 + $0x394] sm:$0xf]
    %v863 = vld [vmem:[#allocation7 + $0x398] sm:$0xf]
    %v864 = vld [vmem:[#allocation7 + $0x39c] sm:$0xf]
    %v865 = vld [vmem:[#allocation7 + $0x3a0] sm:$0xf]
    %v866 = vld [vmem:[#allocation7 + $0x3a4] sm:$0xf]
    %v867 = vld [vmem:[#allocation7 + $0x3a8] sm:$0xf]
    %v868 = vld [vmem:[#allocation7 + $0x3ac] sm:$0xf]
    %v869 = vld [vmem:[#allocation7 + $0x3b0] sm:$0xf]
    %v870 = vld [vmem:[#allocation7 + $0x3b4] sm:$0xf]
    %v871 = vld [vmem:[#allocation7 + $0x3b8] sm:$0xf]
    %v872 = vld [vmem:[#allocation7 + $0x3bc] sm:$0xf]
    %v873 = vld [vmem:[#allocation7 + $0x3c0] sm:$0xf]
    %v874 = vld [vmem:[#allocation7 + $0x3c4] sm:$0xf]
    %v875 = vld [vmem:[#allocation7 + $0x3c8] sm:$0xf]
    %v876 = vld [vmem:[#allocation7 + $0x3cc] sm:$0xf]
    %v877 = vld [vmem:[#allocation7 + $0x3d0] sm:$0xf]
    %v878 = vld [vmem:[#allocation7 + $0x3d4] sm:$0xf]
    %v879 = vld [vmem:[#allocation7 + $0x3d8] sm:$0xf]
    %v880 = vld [vmem:[#allocation7 + $0x3dc] sm:$0xf]
    %v881 = vld [vmem:[#allocation7 + $0x3e0] sm:$0xf]
    %v882 = vld [vmem:[#allocation7 + $0x3e4] sm:$0xf]
    %v883 = vld [vmem:[#allocation7 + $0x3e8] sm:$0xf]
    %v884 = vld [vmem:[#allocation7 + $0x3ec] sm:$0xf]
    %v885 = vld [vmem:[#allocation7 + $0x3f0] sm:$0xf]
    %v886 = vld [vmem:[#allocation7 + $0x3f4] sm:$0xf]
    %v887 = vld [vmem:[#allocation7 + $0x3f8] sm:$0xf]
    %v888 = vld [vmem:[#allocation7 + $0x3fc] sm:$0xf]
    %v1145 = vunpack.c.l.b16 %v633
    %v1146 = vunpack.c.l.b16 %v634
    %v1147 = vunpack.c.l.b16 %v635
    %v1148 = vunpack.c.l.b16 %v636
    %v1149 = vunpack.c.l.b16 %v637
    %v1150 = vunpack.c.l.b16 %v638
    %v1151 = vunpack.c.l.b16 %v639
    %v1152 = vunpack.c.l.b16 %v640
    %v1153 = vunpack.c.l.b16 %v641
    %v1154 = vunpack.c.l.b16 %v642
    %v1155 = vunpack.c.l.b16 %v643
    %v1156 = vunpack.c.l.b16 %v644
    %v1157 = vunpack.c.l.b16 %v645
    %v1158 = vunpack.c.l.b16 %v646
    %v1159 = vunpack.c.l.b16 %v647
    %v1160 = vunpack.c.l.b16 %v648
    %v1161 = vunpack.c.l.b16 %v649
    %v1162 = vunpack.c.l.b16 %v650
    %v1163 = vunpack.c.l.b16 %v651
    %v1164 = vunpack.c.l.b16 %v652
    %v1165 = vunpack.c.l.b16 %v653
    %v1166 = vunpack.c.l.b16 %v654
    %v1167 = vunpack.c.l.b16 %v655
    %v1168 = vunpack.c.l.b16 %v656
    %v1169 = vunpack.c.l.b16 %v657
    %v1170 = vunpack.c.l.b16 %v658
    %v1171 = vunpack.c.l.b16 %v659
    %v1172 = vunpack.c.l.b16 %v660
    %v1173 = vunpack.c.l.b16 %v661
    %v1174 = vunpack.c.l.b16 %v662
    %v1175 = vunpack.c.l.b16 %v663
    %v1176 = vunpack.c.l.b16 %v664
    %v1177 = vunpack.c.l.b16 %v665
    %v1178 = vunpack.c.l.b16 %v666
    %v1179 = vunpack.c.l.b16 %v667
    %v1180 = vunpack.c.l.b16 %v668
    %v1181 = vunpack.c.l.b16 %v669
    %v1182 = vunpack.c.l.b16 %v670
    %v1183 = vunpack.c.l.b16 %v671
    %v1184 = vunpack.c.l.b16 %v672
    %v1185 = vunpack.c.l.b16 %v673
    %v1186 = vunpack.c.l.b16 %v674
    %v1187 = vunpack.c.l.b16 %v675
    %v1188 = vunpack.c.l.b16 %v676
    %v1189 = vunpack.c.l.b16 %v677
    %v1190 = vunpack.c.l.b16 %v678
    %v1191 = vunpack.c.l.b16 %v679
    %v1192 = vunpack.c.l.b16 %v680
    %v1193 = vunpack.c.l.b16 %v681
    %v1194 = vunpack.c.l.b16 %v682
    %v1195 = vunpack.c.l.b16 %v683
    %v1196 = vunpack.c.l.b16 %v684
    %v1197 = vunpack.c.l.b16 %v685
    %v1198 = vunpack.c.l.b16 %v686
    %v1199 = vunpack.c.l.b16 %v687
    %v1200 = vunpack.c.l.b16 %v688
    %v1201 = vunpack.c.l.b16 %v689
    %v1202 = vunpack.c.l.b16 %v690
    %v1203 = vunpack.c.l.b16 %v691
    %v1204 = vunpack.c.l.b16 %v692
    %v1205 = vunpack.c.l.b16 %v693
    %v1206 = vunpack.c.l.b16 %v694
    %v1207 = vunpack.c.l.b16 %v695
    %v1208 = vunpack.c.l.b16 %v696
    %v1209 = vunpack.c.l.b16 %v697
    %v1210 = vunpack.c.l.b16 %v698
    %v1211 = vunpack.c.l.b16 %v699
    %v1212 = vunpack.c.l.b16 %v700
    %v1213 = vunpack.c.l.b16 %v701
    %v1214 = vunpack.c.l.b16 %v702
    %v1215 = vunpack.c.l.b16 %v703
    %v1216 = vunpack.c.l.b16 %v704
    %v1217 = vunpack.c.l.b16 %v705
    %v1218 = vunpack.c.l.b16 %v706
    %v1219 = vunpack.c.l.b16 %v707
    %v1220 = vunpack.c.l.b16 %v708
    %v1221 = vunpack.c.l.b16 %v709
    %v1222 = vunpack.c.l.b16 %v710
    %v1223 = vunpack.c.l.b16 %v711
    %v1224 = vunpack.c.l.b16 %v712
    %v1225 = vunpack.c.l.b16 %v713
    %v1226 = vunpack.c.l.b16 %v714
    %v1227 = vunpack.c.l.b16 %v715
    %v1228 = vunpack.c.l.b16 %v716
    %v1229 = vunpack.c.l.b16 %v717
    %v1230 = vunpack.c.l.b16 %v718
    %v1231 = vunpack.c.l.b16 %v719
    %v1232 = vunpack.c.l.b16 %v720
    %v1233 = vunpack.c.l.b16 %v721
    %v1234 = vunpack.c.l.b16 %v722
    %v1235 = vunpack.c.l.b16 %v723
    %v1236 = vunpack.c.l.b16 %v724
    %v1237 = vunpack.c.l.b16 %v725
    %v1238 = vunpack.c.l.b16 %v726
    %v1239 = vunpack.c.l.b16 %v727
    %v1240 = vunpack.c.l.b16 %v728
    %v1241 = vunpack.c.l.b16 %v729
    %v1242 = vunpack.c.l.b16 %v730
    %v1243 = vunpack.c.l.b16 %v731
    %v1244 = vunpack.c.l.b16 %v732
    %v1245 = vunpack.c.l.b16 %v733
    %v1246 = vunpack.c.l.b16 %v734
    %v1247 = vunpack.c.l.b16 %v735
    %v1248 = vunpack.c.l.b16 %v736
    %v1249 = vunpack.c.l.b16 %v737
    %v1250 = vunpack.c.l.b16 %v738
    %v1251 = vunpack.c.l.b16 %v739
    %v1252 = vunpack.c.l.b16 %v740
    %v1253 = vunpack.c.l.b16 %v741
    %v1254 = vunpack.c.l.b16 %v742
    %v1255 = vunpack.c.l.b16 %v743
    %v1256 = vunpack.c.l.b16 %v744
    %v1257 = vunpack.c.l.b16 %v745
    %v1258 = vunpack.c.l.b16 %v746
    %v1259 = vunpack.c.l.b16 %v747
    %v1260 = vunpack.c.l.b16 %v748
    %v1261 = vunpack.c.l.b16 %v749
    %v1262 = vunpack.c.l.b16 %v750
    %v1263 = vunpack.c.l.b16 %v751
    %v1264 = vunpack.c.l.b16 %v752
    %v1265 = vunpack.c.l.b16 %v753
    %v1266 = vunpack.c.l.b16 %v754
    %v1267 = vunpack.c.l.b16 %v755
    %v1268 = vunpack.c.l.b16 %v756
    %v1269 = vunpack.c.l.b16 %v757
    %v1270 = vunpack.c.l.b16 %v758
    %v1271 = vunpack.c.l.b16 %v759
    %v1272 = vunpack.c.l.b16 %v760
    %v1273 = vunpack.c.l.b16 %v761
    %v1274 = vunpack.c.l.b16 %v762
    %v1275 = vunpack.c.l.b16 %v763
    %v1276 = vunpack.c.l.b16 %v764
    %v1277 = vunpack.c.l.b16 %v765
    %v1278 = vunpack.c.l.b16 %v766
    %v1279 = vunpack.c.l.b16 %v767
    %v1280 = vunpack.c.l.b16 %v768
    %v1281 = vunpack.c.l.b16 %v769
    %v1282 = vunpack.c.l.b16 %v770
    %v1283 = vunpack.c.l.b16 %v771
    %v1284 = vunpack.c.l.b16 %v772
    %v1285 = vunpack.c.l.b16 %v773
    %v1286 = vunpack.c.l.b16 %v774
    %v1287 = vunpack.c.l.b16 %v775
    %v1288 = vunpack.c.l.b16 %v776
    %v1289 = vunpack.c.l.b16 %v777
    %v1290 = vunpack.c.l.b16 %v778
    %v1291 = vunpack.c.l.b16 %v779
    %v1292 = vunpack.c.l.b16 %v780
    %v1293 = vunpack.c.l.b16 %v781
    %v1294 = vunpack.c.l.b16 %v782
    %v1295 = vunpack.c.l.b16 %v783
    %v1296 = vunpack.c.l.b16 %v784
    %v1297 = vunpack.c.l.b16 %v785
    %v1298 = vunpack.c.l.b16 %v786
    %v1299 = vunpack.c.l.b16 %v787
    %v1300 = vunpack.c.l.b16 %v788
    %v1301 = vunpack.c.l.b16 %v789
    %v1302 = vunpack.c.l.b16 %v790
    %v1303 = vunpack.c.l.b16 %v791
    %v1304 = vunpack.c.l.b16 %v792
    %v1305 = vunpack.c.l.b16 %v793
    %v1306 = vunpack.c.l.b16 %v794
    %v1307 = vunpack.c.l.b16 %v795
    %v1308 = vunpack.c.l.b16 %v796
    %v1309 = vunpack.c.l.b16 %v797
    %v1310 = vunpack.c.l.b16 %v798
    %v1311 = vunpack.c.l.b16 %v799
    %v1312 = vunpack.c.l.b16 %v800
    %v1313 = vunpack.c.l.b16 %v801
    %v1314 = vunpack.c.l.b16 %v802
    %v1315 = vunpack.c.l.b16 %v803
    %v1316 = vunpack.c.l.b16 %v804
    %v1317 = vunpack.c.l.b16 %v805
    %v1318 = vunpack.c.l.b16 %v806
    %v1319 = vunpack.c.l.b16 %v807
    %v1320 = vunpack.c.l.b16 %v808
    %v1321 = vunpack.c.l.b16 %v809
    %v1322 = vunpack.c.l.b16 %v810
    %v1323 = vunpack.c.l.b16 %v811
    %v1324 = vunpack.c.l.b16 %v812
    %v1325 = vunpack.c.l.b16 %v813
    %v1326 = vunpack.c.l.b16 %v814
    %v1327 = vunpack.c.l.b16 %v815
    %v1328 = vunpack.c.l.b16 %v816
    %v1329 = vunpack.c.l.b16 %v817
    %v1330 = vunpack.c.l.b16 %v818
    %v1331 = vunpack.c.l.b16 %v819
    %v1332 = vunpack.c.l.b16 %v820
    %v1333 = vunpack.c.l.b16 %v821
    %v1334 = vunpack.c.l.b16 %v822
    %v1335 = vunpack.c.l.b16 %v823
    %v1336 = vunpack.c.l.b16 %v824
    %v1337 = vunpack.c.l.b16 %v825
    %v1338 = vunpack.c.l.b16 %v826
    %v1339 = vunpack.c.l.b16 %v827
    %v1340 = vunpack.c.l.b16 %v828
    %v1341 = vunpack.c.l.b16 %v829
    %v1342 = vunpack.c.l.b16 %v830
    %v1343 = vunpack.c.l.b16 %v831
    %v1344 = vunpack.c.l.b16 %v832
    %v1345 = vunpack.c.l.b16 %v833
    %v1346 = vunpack.c.l.b16 %v834
    %v1347 = vunpack.c.l.b16 %v835
    %v1348 = vunpack.c.l.b16 %v836
    %v1349 = vunpack.c.l.b16 %v837
    %v1350 = vunpack.c.l.b16 %v838
    %v1351 = vunpack.c.l.b16 %v839
    %v1352 = vunpack.c.l.b16 %v840
    %v1353 = vunpack.c.l.b16 %v841
    %v1354 = vunpack.c.l.b16 %v842
    %v1355 = vunpack.c.l.b16 %v843
    %v1356 = vunpack.c.l.b16 %v844
    %v1357 = vunpack.c.l.b16 %v845
    %v1358 = vunpack.c.l.b16 %v846
    %v1359 = vunpack.c.l.b16 %v847
    %v1360 = vunpack.c.l.b16 %v848
    %v1361 = vunpack.c.l.b16 %v849
    %v1362 = vunpack.c.l.b16 %v850
    %v1363 = vunpack.c.l.b16 %v851
    %v1364 = vunpack.c.l.b16 %v852
    %v1365 = vunpack.c.l.b16 %v853
    %v1366 = vunpack.c.l.b16 %v854
    %v1367 = vunpack.c.l.b16 %v855
    %v1368 = vunpack.c.l.b16 %v856
    %v1369 = vunpack.c.l.b16 %v857
    %v1370 = vunpack.c.l.b16 %v858
    %v1371 = vunpack.c.l.b16 %v859
    %v1372 = vunpack.c.l.b16 %v860
    %v1373 = vunpack.c.l.b16 %v861
    %v1374 = vunpack.c.l.b16 %v862
    %v1375 = vunpack.c.l.b16 %v863
    %v1376 = vunpack.c.l.b16 %v864
    %v1377 = vunpack.c.l.b16 %v865
    %v1378 = vunpack.c.l.b16 %v866
    %v1379 = vunpack.c.l.b16 %v867
    %v1380 = vunpack.c.l.b16 %v868
    %v1381 = vunpack.c.l.b16 %v869
    %v1382 = vunpack.c.l.b16 %v870
    %v1383 = vunpack.c.l.b16 %v871
    %v1384 = vunpack.c.l.b16 %v872
    %v1385 = vunpack.c.l.b16 %v873
    %v1386 = vunpack.c.l.b16 %v874
    %v1387 = vunpack.c.l.b16 %v875
    %v1388 = vunpack.c.l.b16 %v876
    %v1389 = vunpack.c.l.b16 %v877
    %v1390 = vunpack.c.l.b16 %v878
    %v1391 = vunpack.c.l.b16 %v879
    %v1392 = vunpack.c.l.b16 %v880
    %v1393 = vunpack.c.l.b16 %v881
    %v1394 = vunpack.c.l.b16 %v882
    %v1395 = vunpack.c.l.b16 %v883
    %v1396 = vunpack.c.l.b16 %v884
    %v1397 = vunpack.c.l.b16 %v885
    %v1398 = vunpack.c.l.b16 %v886
    %v1399 = vunpack.c.l.b16 %v887
    %v1400 = vunpack.c.l.b16 %v888
    %v1401 = vpack.c.b16 %v1146, %v1145
    %v1402 = vpack.c.b16 %v1148, %v1147
    %v1403 = vpack.c.b16 %v1150, %v1149
    %v1404 = vpack.c.b16 %v1152, %v1151
    %v1405 = vpack.c.b16 %v1154, %v1153
    %v1406 = vpack.c.b16 %v1156, %v1155
    %v1407 = vpack.c.b16 %v1158, %v1157
    %v1408 = vpack.c.b16 %v1160, %v1159
    %v1409 = vpack.c.b16 %v1162, %v1161
    %v1410 = vpack.c.b16 %v1164, %v1163
    %v1411 = vpack.c.b16 %v1166, %v1165
    %v1412 = vpack.c.b16 %v1168, %v1167
    %v1413 = vpack.c.b16 %v1170, %v1169
    %v1414 = vpack.c.b16 %v1172, %v1171
    %v1415 = vpack.c.b16 %v1174, %v1173
    %v1416 = vpack.c.b16 %v1176, %v1175
    %v1417 = vpack.c.b16 %v1178, %v1177
    %v1418 = vpack.c.b16 %v1180, %v1179
    %v1419 = vpack.c.b16 %v1182, %v1181
    %v1420 = vpack.c.b16 %v1184, %v1183
    %v1421 = vpack.c.b16 %v1186, %v1185
    %v1422 = vpack.c.b16 %v1188, %v1187
    %v1423 = vpack.c.b16 %v1190, %v1189
    %v1424 = vpack.c.b16 %v1192, %v1191
    %v1425 = vpack.c.b16 %v1194, %v1193
    %v1426 = vpack.c.b16 %v1196, %v1195
    %v1427 = vpack.c.b16 %v1198, %v1197
    %v1428 = vpack.c.b16 %v1200, %v1199
    %v1429 = vpack.c.b16 %v1202, %v1201
    %v1430 = vpack.c.b16 %v1204, %v1203
    %v1431 = vpack.c.b16 %v1206, %v1205
    %v1432 = vpack.c.b16 %v1208, %v1207
    %v1433 = vpack.c.b16 %v1210, %v1209
    %v1434 = vpack.c.b16 %v1212, %v1211
    %v1435 = vpack.c.b16 %v1214, %v1213
    %v1436 = vpack.c.b16 %v1216, %v1215
    %v1437 = vpack.c.b16 %v1218, %v1217
    %v1438 = vpack.c.b16 %v1220, %v1219
    %v1439 = vpack.c.b16 %v1222, %v1221
    %v1440 = vpack.c.b16 %v1224, %v1223
    %v1441 = vpack.c.b16 %v1226, %v1225
    %v1442 = vpack.c.b16 %v1228, %v1227
    %v1443 = vpack.c.b16 %v1230, %v1229
    %v1444 = vpack.c.b16 %v1232, %v1231
    %v1445 = vpack.c.b16 %v1234, %v1233
    %v1446 = vpack.c.b16 %v1236, %v1235
    %v1447 = vpack.c.b16 %v1238, %v1237
    %v1448 = vpack.c.b16 %v1240, %v1239
    %v1449 = vpack.c.b16 %v1242, %v1241
    %v1450 = vpack.c.b16 %v1244, %v1243
    %v1451 = vpack.c.b16 %v1246, %v1245
    %v1452 = vpack.c.b16 %v1248, %v1247
    %v1453 = vpack.c.b16 %v1250, %v1249
    %v1454 = vpack.c.b16 %v1252, %v1251
    %v1455 = vpack.c.b16 %v1254, %v1253
    %v1456 = vpack.c.b16 %v1256, %v1255
    %v1457 = vpack.c.b16 %v1258, %v1257
    %v1458 = vpack.c.b16 %v1260, %v1259
    %v1459 = vpack.c.b16 %v1262, %v1261
    %v1460 = vpack.c.b16 %v1264, %v1263
    %v1461 = vpack.c.b16 %v1266, %v1265
    %v1462 = vpack.c.b16 %v1268, %v1267
    %v1463 = vpack.c.b16 %v1270, %v1269
    %v1464 = vpack.c.b16 %v1272, %v1271
    %v1465 = vpack.c.b16 %v1274, %v1273
    %v1466 = vpack.c.b16 %v1276, %v1275
    %v1467 = vpack.c.b16 %v1278, %v1277
    %v1468 = vpack.c.b16 %v1280, %v1279
    %v1469 = vpack.c.b16 %v1282, %v1281
    %v1470 = vpack.c.b16 %v1284, %v1283
    %v1471 = vpack.c.b16 %v1286, %v1285
    %v1472 = vpack.c.b16 %v1288, %v1287
    %v1473 = vpack.c.b16 %v1290, %v1289
    %v1474 = vpack.c.b16 %v1292, %v1291
    %v1475 = vpack.c.b16 %v1294, %v1293
    %v1476 = vpack.c.b16 %v1296, %v1295
    %v1477 = vpack.c.b16 %v1298, %v1297
    %v1478 = vpack.c.b16 %v1300, %v1299
    %v1479 = vpack.c.b16 %v1302, %v1301
    %v1480 = vpack.c.b16 %v1304, %v1303
    %v1481 = vpack.c.b16 %v1306, %v1305
    %v1482 = vpack.c.b16 %v1308, %v1307
    %v1483 = vpack.c.b16 %v1310, %v1309
    %v1484 = vpack.c.b16 %v1312, %v1311
    %v1485 = vpack.c.b16 %v1314, %v1313
    %v1486 = vpack.c.b16 %v1316, %v1315
    %v1487 = vpack.c.b16 %v1318, %v1317
    %v1488 = vpack.c.b16 %v1320, %v1319
    %v1489 = vpack.c.b16 %v1322, %v1321
    %v1490 = vpack.c.b16 %v1324, %v1323
    %v1491 = vpack.c.b16 %v1326, %v1325
    %v1492 = vpack.c.b16 %v1328, %v1327
    %v1493 = vpack.c.b16 %v1330, %v1329
    %v1494 = vpack.c.b16 %v1332, %v1331
    %v1495 = vpack.c.b16 %v1334, %v1333
    %v1496 = vpack.c.b16 %v1336, %v1335
    %v1497 = vpack.c.b16 %v1338, %v1337
    %v1498 = vpack.c.b16 %v1340, %v1339
    %v1499 = vpack.c.b16 %v1342, %v1341
    %v1500 = vpack.c.b16 %v1344, %v1343
    %v1501 = vpack.c.b16 %v1346, %v1345
    %v1502 = vpack.c.b16 %v1348, %v1347
    %v1503 = vpack.c.b16 %v1350, %v1349
    %v1504 = vpack.c.b16 %v1352, %v1351
    %v1505 = vpack.c.b16 %v1354, %v1353
    %v1506 = vpack.c.b16 %v1356, %v1355
    %v1507 = vpack.c.b16 %v1358, %v1357
    %v1508 = vpack.c.b16 %v1360, %v1359
    %v1509 = vpack.c.b16 %v1362, %v1361
    %v1510 = vpack.c.b16 %v1364, %v1363
    %v1511 = vpack.c.b16 %v1366, %v1365
    %v1512 = vpack.c.b16 %v1368, %v1367
    %v1513 = vpack.c.b16 %v1370, %v1369
    %v1514 = vpack.c.b16 %v1372, %v1371
    %v1515 = vpack.c.b16 %v1374, %v1373
    %v1516 = vpack.c.b16 %v1376, %v1375
    %v1517 = vpack.c.b16 %v1378, %v1377
    %v1518 = vpack.c.b16 %v1380, %v1379
    %v1519 = vpack.c.b16 %v1382, %v1381
    %v1520 = vpack.c.b16 %v1384, %v1383
    %v1521 = vpack.c.b16 %v1386, %v1385
    %v1522 = vpack.c.b16 %v1388, %v1387
    %v1523 = vpack.c.b16 %v1390, %v1389
    %v1524 = vpack.c.b16 %v1392, %v1391
    %v1525 = vpack.c.b16 %v1394, %v1393
    %v1526 = vpack.c.b16 %v1396, %v1395
    %v1527 = vpack.c.b16 %v1398, %v1397
    %v1528 = vpack.c.b16 %v1400, %v1399
    %1657 = vmatprep.subr.bf16.mxu0 0
    %1658 = vmatpush1.bf16.msra.mxu0 %v1408
    %1659 = vmatprep.subr.bf16.mxu0 0
    %1660 = vmatpush1.bf16.msra.mxu0 %v1407
    %1661 = vmatprep.subr.bf16.mxu0 0
    %1662 = vmatpush1.bf16.msra.mxu0 %v1406
    %1663 = vmatprep.subr.bf16.mxu0 0
    %1664 = vmatpush1.bf16.msra.mxu0 %v1405
    %1665 = vmatprep.subr.bf16.mxu0 0
    %1666 = vmatpush1.bf16.msra.mxu0 %v1404
    %1667 = vmatprep.subr.bf16.mxu0 0
    %1668 = vmatpush1.bf16.msra.mxu0 %v1403
    %1669 = vmatprep.subr.bf16.mxu0 0
    %1670 = vmatpush1.bf16.msra.mxu0 %v1402
    %1671 = vmatprep.subr.bf16.mxu0 0
    %1672 = vmatpush1.bf16.msra.mxu0 %v1401
    %1673 = vmatprep.subr.bf16.mxu0 0
    %1674 = vmatpush2.bf16.msra.mxu0 %v1416
    %1675 = vmatprep.subr.bf16.mxu0 0
    %1676 = vmatpush2.bf16.msra.mxu0 %v1415
    %1677 = vmatprep.subr.bf16.mxu0 0
    %1678 = vmatpush2.bf16.msra.mxu0 %v1414
    %1679 = vmatprep.subr.bf16.mxu0 0
    %1680 = vmatpush2.bf16.msra.mxu0 %v1413
    %1681 = vmatprep.subr.bf16.mxu0 0
    %1682 = vmatpush2.bf16.msra.mxu0 %v1412
    %1683 = vmatprep.subr.bf16.mxu0 0
    %1684 = vmatpush2.bf16.msra.mxu0 %v1411
    %1685 = vmatprep.subr.bf16.mxu0 0
    %1686 = vmatpush2.bf16.msra.mxu0 %v1410
    %1687 = vmatprep.subr.bf16.mxu0 0
    %1688 = vmatpush2.bf16.msra.mxu0 %v1409
    %1689 = vmatprep.mubr.bf16.mxu0 %v618
    %1690 = vmatmul.mubr.bf16.gmra.mxu0 %v617
    %v1691 = vpop.f32.mrf.mxu0
    %v1692 = vadd.f32 0.0, %v1691
    %v1693 = vpop.f32.mrf.mxu0
    %v1694 = vpop.f32.mrf.mxu0
    %v1695 = vpop.f32.mrf.mxu0
    %1696 = vdwg.mxu0
    %1697 = vmatprep.subr.bf16.mxu0 0
    %1698 = vmatpush1.bf16.msra.mxu0 %v1424
    %1699 = vmatprep.subr.bf16.mxu0 0
    %1700 = vmatpush1.bf16.msra.mxu0 %v1423
    %1701 = vmatprep.subr.bf16.mxu0 0
    %1702 = vmatpush1.bf16.msra.mxu0 %v1422
    %1703 = vmatprep.subr.bf16.mxu0 0
    %1704 = vmatpush1.bf16.msra.mxu0 %v1421
    %1705 = vmatprep.subr.bf16.mxu0 0
    %1706 = vmatpush1.bf16.msra.mxu0 %v1420
    %1707 = vmatprep.subr.bf16.mxu0 0
    %1708 = vmatpush1.bf16.msra.mxu0 %v1419
    %1709 = vmatprep.subr.bf16.mxu0 0
    %1710 = vmatpush1.bf16.msra.mxu0 %v1418
    %1711 = vmatprep.subr.bf16.mxu0 0
    %1712 = vmatpush1.bf16.msra.mxu0 %v1417
    %1713 = vmatprep.subr.bf16.mxu0 0
    %1714 = vmatpush2.bf16.msra.mxu0 %v1432
    %1715 = vmatprep.subr.bf16.mxu0 0
    %1716 = vmatpush2.bf16.msra.mxu0 %v1431
    %1717 = vmatprep.subr.bf16.mxu0 0
    %1718 = vmatpush2.bf16.msra.mxu0 %v1430
    %1719 = vmatprep.subr.bf16.mxu0 0
    %1720 = vmatpush2.bf16.msra.mxu0 %v1429
    %1721 = vmatprep.subr.bf16.mxu0 0
    %1722 = vmatpush2.bf16.msra.mxu0 %v1428
    %1723 = vmatprep.subr.bf16.mxu0 0
    %1724 = vmatpush2.bf16.msra.mxu0 %v1427
    %1725 = vmatprep.subr.bf16.mxu0 0
    %1726 = vmatpush2.bf16.msra.mxu0 %v1426
    %1727 = vmatprep.subr.bf16.mxu0 0
    %1728 = vmatpush2.bf16.msra.mxu0 %v1425
    %1729 = vmatprep.mubr.bf16.mxu0 %v620
    %1730 = vmatmul.mubr.bf16.gmra.mxu0 %v619
    %v1731 = vpop.f32.mrf.mxu0
    %v1732 = vadd.f32 %v1692, %v1731
    %v1733 = vpop.f32.mrf.mxu0
    %v1734 = vpop.f32.mrf.mxu0
    %v1735 = vpop.f32.mrf.mxu0
    %1736 = vdwg.mxu0
    %1737 = vmatprep.subr.bf16.mxu0 0
    %1738 = vmatpush1.bf16.msra.mxu0 %v1440
    %1739 = vmatprep.subr.bf16.mxu0 0
    %1740 = vmatpush1.bf16.msra.mxu0 %v1439
    %1741 = vmatprep.subr.bf16.mxu0 0
    %1742 = vmatpush1.bf16.msra.mxu0 %v1438
    %1743 = vmatprep.subr.bf16.mxu0 0
    %1744 = vmatpush1.bf16.msra.mxu0 %v1437
    %1745 = vmatprep.subr.bf16.mxu0 0
    %1746 = vmatpush1.bf16.msra.mxu0 %v1436
    %1747 = vmatprep.subr.bf16.mxu0 0
    %1748 = vmatpush1.bf16.msra.mxu0 %v1435
    %1749 = vmatprep.subr.bf16.mxu0 0
    %1750 = vmatpush1.bf16.msra.mxu0 %v1434
    %1751 = vmatprep.subr.bf16.mxu0 0
    %1752 = vmatpush1.bf16.msra.mxu0 %v1433
    %1753 = vmatprep.subr.bf16.mxu0 0
    %1754 = vmatpush2.bf16.msra.mxu0 %v1448
    %1755 = vmatprep.subr.bf16.mxu0 0
    %1756 = vmatpush2.bf16.msra.mxu0 %v1447
    %1757 = vmatprep.subr.bf16.mxu0 0
    %1758 = vmatpush2.bf16.msra.mxu0 %v1446
    %1759 = vmatprep.subr.bf16.mxu0 0
    %1760 = vmatpush2.bf16.msra.mxu0 %v1445
    %1761 = vmatprep.subr.bf16.mxu0 0
    %1762 = vmatpush2.bf16.msra.mxu0 %v1444
    %1763 = vmatprep.subr.bf16.mxu0 0
    %1764 = vmatpush2.bf16.msra.mxu0 %v1443
    %1765 = vmatprep.subr.bf16.mxu0 0
    %1766 = vmatpush2.bf16.msra.mxu0 %v1442
    %1767 = vmatprep.subr.bf16.mxu0 0
    %1768 = vmatpush2.bf16.msra.mxu0 %v1441
    %1769 = vmatprep.mubr.bf16.mxu0 %v622
    %1770 = vmatmul.mubr.bf16.gmra.mxu0 %v621
    %v1771 = vpop.f32.mrf.mxu0
    %v1772 = vadd.f32 %v1732, %v1771
    %v1773 = vpop.f32.mrf.mxu0
    %v1774 = vpop.f32.mrf.mxu0
    %v1775 = vpop.f32.mrf.mxu0
    %1776 = vdwg.mxu0
    %1777 = vmatprep.subr.bf16.mxu0 0
    %1778 = vmatpush1.bf16.msra.mxu0 %v1456
    %1779 = vmatprep.subr.bf16.mxu0 0
    %1780 = vmatpush1.bf16.msra.mxu0 %v1455
    %1781 = vmatprep.subr.bf16.mxu0 0
    %1782 = vmatpush1.bf16.msra.mxu0 %v1454
    %1783 = vmatprep.subr.bf16.mxu0 0
    %1784 = vmatpush1.bf16.msra.mxu0 %v1453
    %1785 = vmatprep.subr.bf16.mxu0 0
    %1786 = vmatpush1.bf16.msra.mxu0 %v1452
    %1787 = vmatprep.subr.bf16.mxu0 0
    %1788 = vmatpush1.bf16.msra.mxu0 %v1451
    %1789 = vmatprep.subr.bf16.mxu0 0
    %1790 = vmatpush1.bf16.msra.mxu0 %v1450
    %1791 = vmatprep.subr.bf16.mxu0 0
    %1792 = vmatpush1.bf16.msra.mxu0 %v1449
    %1793 = vmatprep.subr.bf16.mxu0 0
    %1794 = vmatpush2.bf16.msra.mxu0 %v1464
    %1795 = vmatprep.subr.bf16.mxu0 0
    %1796 = vmatpush2.bf16.msra.mxu0 %v1463
    %1797 = vmatprep.subr.bf16.mxu0 0
    %1798 = vmatpush2.bf16.msra.mxu0 %v1462
    %1799 = vmatprep.subr.bf16.mxu0 0
    %1800 = vmatpush2.bf16.msra.mxu0 %v1461
    %1801 = vmatprep.subr.bf16.mxu0 0
    %1802 = vmatpush2.bf16.msra.mxu0 %v1460
    %1803 = vmatprep.subr.bf16.mxu0 0
    %1804 = vmatpush2.bf16.msra.mxu0 %v1459
    %1805 = vmatprep.subr.bf16.mxu0 0
    %1806 = vmatpush2.bf16.msra.mxu0 %v1458
    %1807 = vmatprep.subr.bf16.mxu0 0
    %1808 = vmatpush2.bf16.msra.mxu0 %v1457
    %1809 = vmatprep.mubr.bf16.mxu0 %v624
    %1810 = vmatmul.mubr.bf16.gmra.mxu0 %v623
    %v1811 = vpop.f32.mrf.mxu0
    %v1812 = vadd.f32 %v1772, %v1811
    %v1813 = vpop.f32.mrf.mxu0
    %v1814 = vpop.f32.mrf.mxu0
    %v1815 = vpop.f32.mrf.mxu0
    %1816 = vdwg.mxu0
    %1817 = vmatprep.subr.bf16.mxu0 0
    %1818 = vmatpush1.bf16.msra.mxu0 %v1472
    %1819 = vmatprep.subr.bf16.mxu0 0
    %1820 = vmatpush1.bf16.msra.mxu0 %v1471
    %1821 = vmatprep.subr.bf16.mxu0 0
    %1822 = vmatpush1.bf16.msra.mxu0 %v1470
    %1823 = vmatprep.subr.bf16.mxu0 0
    %1824 = vmatpush1.bf16.msra.mxu0 %v1469
    %1825 = vmatprep.subr.bf16.mxu0 0
    %1826 = vmatpush1.bf16.msra.mxu0 %v1468
    %1827 = vmatprep.subr.bf16.mxu0 0
    %1828 = vmatpush1.bf16.msra.mxu0 %v1467
    %1829 = vmatprep.subr.bf16.mxu0 0
    %1830 = vmatpush1.bf16.msra.mxu0 %v1466
    %1831 = vmatprep.subr.bf16.mxu0 0
    %1832 = vmatpush1.bf16.msra.mxu0 %v1465
    %1833 = vmatprep.subr.bf16.mxu0 0
    %1834 = vmatpush2.bf16.msra.mxu0 %v1480
    %1835 = vmatprep.subr.bf16.mxu0 0
    %1836 = vmatpush2.bf16.msra.mxu0 %v1479
    %1837 = vmatprep.subr.bf16.mxu0 0
    %1838 = vmatpush2.bf16.msra.mxu0 %v1478
    %1839 = vmatprep.subr.bf16.mxu0 0
    %1840 = vmatpush2.bf16.msra.mxu0 %v1477
    %1841 = vmatprep.subr.bf16.mxu0 0
    %1842 = vmatpush2.bf16.msra.mxu0 %v1476
    %1843 = vmatprep.subr.bf16.mxu0 0
    %1844 = vmatpush2.bf16.msra.mxu0 %v1475
    %1845 = vmatprep.subr.bf16.mxu0 0
    %1846 = vmatpush2.bf16.msra.mxu0 %v1474
    %1847 = vmatprep.subr.bf16.mxu0 0
    %1848 = vmatpush2.bf16.msra.mxu0 %v1473
    %1849 = vmatprep.mubr.bf16.mxu0 %v626
    %1850 = vmatmul.mubr.bf16.gmra.mxu0 %v625
    %v1851 = vpop.f32.mrf.mxu0
    %v1852 = vadd.f32 %v1812, %v1851
    %v1853 = vpop.f32.mrf.mxu0
    %v1854 = vpop.f32.mrf.mxu0
    %v1855 = vpop.f32.mrf.mxu0
    %1856 = vdwg.mxu0
    %1857 = vmatprep.subr.bf16.mxu0 0
    %1858 = vmatpush1.bf16.msra.mxu0 %v1488
    %1859 = vmatprep.subr.bf16.mxu0 0
    %1860 = vmatpush1.bf16.msra.mxu0 %v1487
    %1861 = vmatprep.subr.bf16.mxu0 0
    %1862 = vmatpush1.bf16.msra.mxu0 %v1486
    %1863 = vmatprep.subr.bf16.mxu0 0
    %1864 = vmatpush1.bf16.msra.mxu0 %v1485
    %1865 = vmatprep.subr.bf16.mxu0 0
    %1866 = vmatpush1.bf16.msra.mxu0 %v1484
    %1867 = vmatprep.subr.bf16.mxu0 0
    %1868 = vmatpush1.bf16.msra.mxu0 %v1483
    %1869 = vmatprep.subr.bf16.mxu0 0
    %1870 = vmatpush1.bf16.msra.mxu0 %v1482
    %1871 = vmatprep.subr.bf16.mxu0 0
    %1872 = vmatpush1.bf16.msra.mxu0 %v1481
    %1873 = vmatprep.subr.bf16.mxu0 0
    %1874 = vmatpush2.bf16.msra.mxu0 %v1496
    %1875 = vmatprep.subr.bf16.mxu0 0
    %1876 = vmatpush2.bf16.msra.mxu0 %v1495
    %1877 = vmatprep.subr.bf16.mxu0 0
    %1878 = vmatpush2.bf16.msra.mxu0 %v1494
    %1879 = vmatprep.subr.bf16.mxu0 0
    %1880 = vmatpush2.bf16.msra.mxu0 %v1493
    %1881 = vmatprep.subr.bf16.mxu0 0
    %1882 = vmatpush2.bf16.msra.mxu0 %v1492
    %1883 = vmatprep.subr.bf16.mxu0 0
    %1884 = vmatpush2.bf16.msra.mxu0 %v1491
    %1885 = vmatprep.subr.bf16.mxu0 0
    %1886 = vmatpush2.bf16.msra.mxu0 %v1490
    %1887 = vmatprep.subr.bf16.mxu0 0
    %1888 = vmatpush2.bf16.msra.mxu0 %v1489
    %1889 = vmatprep.mubr.bf16.mxu0 %v628
    %1890 = vmatmul.mubr.bf16.gmra.mxu0 %v627
    %v1891 = vpop.f32.mrf.mxu0
    %v1892 = vadd.f32 %v1852, %v1891
    %v1893 = vpop.f32.mrf.mxu0
    %v1894 = vpop.f32.mrf.mxu0
    %v1895 = vpop.f32.mrf.mxu0
    %1896 = vdwg.mxu0
    %1897 = vmatprep.subr.bf16.mxu0 0
    %1898 = vmatpush1.bf16.msra.mxu0 %v1504
    %1899 = vmatprep.subr.bf16.mxu0 0
    %1900 = vmatpush1.bf16.msra.mxu0 %v1503
    %1901 = vmatprep.subr.bf16.mxu0 0
    %1902 = vmatpush1.bf16.msra.mxu0 %v1502
    %1903 = vmatprep.subr.bf16.mxu0 0
    %1904 = vmatpush1.bf16.msra.mxu0 %v1501
    %1905 = vmatprep.subr.bf16.mxu0 0
    %1906 = vmatpush1.bf16.msra.mxu0 %v1500
    %1907 = vmatprep.subr.bf16.mxu0 0
    %1908 = vmatpush1.bf16.msra.mxu0 %v1499
    %1909 = vmatprep.subr.bf16.mxu0 0
    %1910 = vmatpush1.bf16.msra.mxu0 %v1498
    %1911 = vmatprep.subr.bf16.mxu0 0
    %1912 = vmatpush1.bf16.msra.mxu0 %v1497
    %1913 = vmatprep.subr.bf16.mxu0 0
    %1914 = vmatpush2.bf16.msra.mxu0 %v1512
    %1915 = vmatprep.subr.bf16.mxu0 0
    %1916 = vmatpush2.bf16.msra.mxu0 %v1511
    %1917 = vmatprep.subr.bf16.mxu0 0
    %1918 = vmatpush2.bf16.msra.mxu0 %v1510
    %1919 = vmatprep.subr.bf16.mxu0 0
    %1920 = vmatpush2.bf16.msra.mxu0 %v1509
    %1921 = vmatprep.subr.bf16.mxu0 0
    %1922 = vmatpush2.bf16.msra.mxu0 %v1508
    %1923 = vmatprep.subr.bf16.mxu0 0
    %1924 = vmatpush2.bf16.msra.mxu0 %v1507
    %1925 = vmatprep.subr.bf16.mxu0 0
    %1926 = vmatpush2.bf16.msra.mxu0 %v1506
    %1927 = vmatprep.subr.bf16.mxu0 0
    %1928 = vmatpush2.bf16.msra.mxu0 %v1505
    %1929 = vmatprep.mubr.bf16.mxu0 %v630
    %1930 = vmatmul.mubr.bf16.gmra.mxu0 %v629
    %v1931 = vpop.f32.mrf.mxu0
    %v1932 = vadd.f32 %v1892, %v1931
    %v1933 = vpop.f32.mrf.mxu0
    %v1934 = vpop.f32.mrf.mxu0
    %v1935 = vpop.f32.mrf.mxu0
    %1936 = vdwg.mxu0
    %1937 = vmatprep.subr.bf16.mxu0 0
    %1938 = vmatpush1.bf16.msra.mxu0 %v1520
    %1939 = vmatprep.subr.bf16.mxu0 0
    %1940 = vmatpush1.bf16.msra.mxu0 %v1519
    %1941 = vmatprep.subr.bf16.mxu0 0
    %1942 = vmatpush1.bf16.msra.mxu0 %v1518
    %1943 = vmatprep.subr.bf16.mxu0 0
    %1944 = vmatpush1.bf16.msra.mxu0 %v1517
    %1945 = vmatprep.subr.bf16.mxu0 0
    %1946 = vmatpush1.bf16.msra.mxu0 %v1516
    %1947 = vmatprep.subr.bf16.mxu0 0
    %1948 = vmatpush1.bf16.msra.mxu0 %v1515
    %1949 = vmatprep.subr.bf16.mxu0 0
    %1950 = vmatpush1.bf16.msra.mxu0 %v1514
    %1951 = vmatprep.subr.bf16.mxu0 0
    %1952 = vmatpush1.bf16.msra.mxu0 %v1513
    %1953 = vmatprep.subr.bf16.mxu0 0
    %1954 = vmatpush2.bf16.msra.mxu0 %v1528
    %1955 = vmatprep.subr.bf16.mxu0 0
    %1956 = vmatpush2.bf16.msra.mxu0 %v1527
    %1957 = vmatprep.subr.bf16.mxu0 0
    %1958 = vmatpush2.bf16.msra.mxu0 %v1526
    %1959 = vmatprep.subr.bf16.mxu0 0
    %1960 = vmatpush2.bf16.msra.mxu0 %v1525
    %1961 = vmatprep.subr.bf16.mxu0 0
    %1962 = vmatpush2.bf16.msra.mxu0 %v1524
    %1963 = vmatprep.subr.bf16.mxu0 0
    %1964 = vmatpush2.bf16.msra.mxu0 %v1523
    %1965 = vmatprep.subr.bf16.mxu0 0
    %1966 = vmatpush2.bf16.msra.mxu0 %v1522
    %1967 = vmatprep.subr.bf16.mxu0 0
    %1968 = vmatpush2.bf16.msra.mxu0 %v1521
    %1969 = vmatprep.mubr.bf16.mxu0 %v632
    %1970 = vmatmul.mubr.bf16.gmra.mxu0 %v631
    %v1971 = vpop.f32.mrf.mxu0
    %v1972 = vadd.f32 %v1932, %v1971
    %v1973 = vpop.f32.mrf.mxu0
    %v1974 = vpop.f32.mrf.mxu0
    %v1975 = vpop.f32.mrf.mxu0
    %1976 = vdwg.mxu0
    %1977 = vst [vmem:[#allocation8] sm:$0xff] %v1972
    // Predicated region
    $region26: #{tpu_custom_call.1} parent=1 // pred_check
      _
    $region27: #{tpu_custom_call.1} parent=1 // pred_check_branch
      %1979 = sbr.rel (0) target = $region29
    $region28: #{tpu_custom_call.1} parent=1 // pred_region
      %s1981 = ssub.s32 128, 32
      %1982 = vsyncadd [#allocation4], %s1981
      %s1983 = sshll.u32 [#allocation8], 4
      %s1984 = int_to_ptr.vmem [resolvable:$true] %s1983
      %1989 = dma.vmem_to_hbm [thread:$0]  %s1984, 32, %s3, [#allocation4], 32, 32, 2
    $region29: #{tpu_custom_call.1} parent=1 // pred_fallthru
      _
    // Predicated region
    $region30: #{tpu_custom_call.1} parent=1 // pred_check
      _
    $region31: #{tpu_custom_call.1} parent=1 // pred_check_branch
      %1991 = sbr.rel (0) target = $region33
    $region32: #{tpu_custom_call.1} parent=1 // pred_region
      %1992 = dma.done [#allocation4], 128
    $region33: #{tpu_custom_call.1} parent=1 // pred_fallthru
      _
    %1993 = vsyncpa [#allocation3], 1
    %1994 = vsyncpa [#allocation6], 1
    %1995 = vsyncpa [#allocation4], 1

</llo_original>
